<compile_context>
chip_gen: v5e
topology: v5e:2x2
jax: 0.10.0
libtpu: 0.0.40
codegen_flags: <defaults>
</compile_context>

<pallas_src>
import functools

import jax
import jax.numpy as jnp
import numpy as np
from jax import lax
from jax.experimental import pallas as pl

NHEAD = 8
_LN_EPS = 1e-5
_L2_EPS_SQ = 1e-24          # F.normalize: x / max(||x||, 1e-12)


# ----------------------------- kernel helpers -------------------------------

def _mm(a, wt):
    return jnp.dot(a, wt, preferred_element_type=jnp.float32)


def _layernorm(x, g, b):
    mu = jnp.mean(x, axis=-1, keepdims=True)
    xc = x - mu
    var = jnp.mean(xc * xc, axis=-1, keepdims=True)
    return xc * lax.rsqrt(var + _LN_EPS) * g + b


def _l2_normalize(x):
    n2 = jnp.sum(x * x, axis=-1, keepdims=True)
    return x * lax.rsqrt(jnp.maximum(n2, _L2_EPS_SQ))


# ----------------------------- Pallas kernels -------------------------------

def _conv_relu_kernel(x_ref, wt_ref, b_ref, o_ref):
    """m_remained 1x1 conv as a per-pixel channel matmul: relu(x @ Wc^T + b)."""
    y = _mm(x_ref[...], wt_ref[...]) + b_ref[...]
    o_ref[...] = jnp.maximum(y, 0.0).astype(o_ref.dtype)


def _rab_kernel(txt_ref, kv_ref, seg_ref, segt_ref, hm_ref, hmt_ref,
                wr_ref, br_ref, g1_ref, b1_ref,
                wq_ref, bq_ref, wk_ref, bk_ref, wv_ref, bv_ref,
                wo_ref, bo_ref, g2_ref, b2_ref,
                wfc_ref, bfc_ref, wpr_ref, bpr_ref,
                o_ref, *, n_head, seq_len):
    """Fused m_residual + ResidualAttentionBlock (query length 1) + final ReLU.

    txt: (b, d) text features; kv: (b*S, d) batch-major key/value sequence.
    seg (b*S, b) / segt (b, b*S): one-hot segment (batch) selection matrices.
    hm (d, H) / hmt (H, d): one-hot channel->head masks.
    """
    f32 = jnp.float32
    txt = txt_ref[...].astype(f32)
    kv = kv_ref[...].astype(f32)
    seg, segt = seg_ref[...], segt_ref[...]
    hm, hmt = hm_ref[...], hmt_ref[...]
    d = txt.shape[-1]
    scale = (d // n_head) ** -0.5

    # q = relu(m_residual(text_features))          (dropout6 = identity)
    q_in = jnp.maximum(_mm(txt, wr_ref[...]) + br_ref[...], 0.0)          # (b, d)

    # ln_1 is shared by q, k and v; k and v are the same tensor -> one LN call.
    g1, b1 = g1_ref[...], b1_ref[...]
    qn = _layernorm(q_in, g1, b1)                                          # (b, d)
    kvn = _layernorm(kv, g1, b1)                                           # (bS, d)

    # in-projection (torch MHA packs q/k/v rows of in_proj_weight); q pre-scaled.
    qp = (_mm(qn, wq_ref[...]) + bq_ref[...]) * scale                      # (b, d)
    kp = _mm(kvn, wk_ref[...]) + bk_ref[...]                               # (bS, d)
    vp = _mm(kvn, wv_ref[...]) + bv_ref[...]                               # (bS, d)

    # Multi-head attention, query length 1, fully 2-D (no per-head grid/loop):
    qe = _mm(seg, qp)                          # (bS, d) query broadcast over its segment
    s = _mm(qe * kp, hm)                       # (bS, H) per-head scores
    s = s - jnp.max(s, axis=0, keepdims=True)  # per-head shift; softmax-invariant
    e = jnp.exp(s)
    den = _mm(segt, e)                         # (b, H) per-(batch, head) normalizers
    p = e * _mm(seg, pl.reciprocal(den, approx=True))                      # (bS, H)
    pv = _mm(p, hmt) * vp                      # (bS, d) probability-weighted values
    ctx = _mm(segt, pv)                        # (b, d) heads concatenated channel-wise
    attn = _mm(ctx, wo_ref[...]) + bo_ref[...]                             # (b, d)

    # x = v.mean(dim=0) + attn   (v = pre-LayerNorm values)
    vmean = _mm(segt, kv) * (1.0 / seq_len)                                # (b, d)
    x = vmean + attn

    # x = x + mlp(ln_2(x)),  mlp = Linear -> QuickGELU -> Linear
    xn = _layernorm(x, g2_ref[...], b2_ref[...])
    h = _mm(xn, wfc_ref[...]) + bfc_ref[...]
    h = h * jax.nn.sigmoid(1.702 * h)
    x = x + _mm(h, wpr_ref[...]) + bpr_ref[...]

    # based_feature = relu(x)                     (dropout4 = identity)
    o_ref[...] = jnp.maximum(x, 0.0).astype(o_ref.dtype)


def _head_kernel(txt_ref, img_ref, based_ref, tgt_ref,
                 wt_ref, bt_ref, wi_ref, bi_ref,
                 wci_ref, wct_ref, bc_ref,
                 wdi_ref, wdt_ref, bd1_ref,
                 wd2_ref, bd2_ref, wout_ref, bout_ref,
                 o_ref, *, logit_scale):
    """Fused projection head + residual mix + L2 norms + scaled logits."""
    f32 = jnp.float32
    txt = txt_ref[...].astype(f32)            # (b, D)
    img = img_ref[...].astype(f32)            # (b, D) time-pooled ref_high
    based = based_ref[...].astype(f32)        # (b, D)

    tp = jnp.maximum(_mm(txt, wt_ref[...]) + bt_ref[...], 0.0)             # (b, P)
    ip = jnp.maximum(_mm(img, wi_ref[...]) + bi_ref[...], 0.0)             # (b, P)

    # cat(image_proj, text_proj) @ W.T == ip @ Wt[:P] + tp @ Wt[P:] (pre-split).
    comb = jnp.maximum(_mm(ip, wci_ref[...]) + _mm(tp, wct_ref[...]) + bc_ref[...], 0.0)
    dsh = jnp.maximum(_mm(ip, wdi_ref[...]) + _mm(tp, wdt_ref[...]) + bd1_ref[...], 0.0)
    ds = jax.nn.sigmoid(jnp.sum(dsh * wd2_ref[...], axis=-1, keepdims=True)
                        + bd2_ref[...])                                    # (b, 1)
    out = _mm(comb, wout_ref[...]) + bout_ref[...]                         # (b, D)

    pred = out + ds * txt + (1.0 - ds) * img + based
    pred = _l2_normalize(pred)

    tgt = _l2_normalize(tgt_ref[...].astype(f32))                          # (Nt, D)
    logits = lax.dot_general(pred, tgt, (((1,), (1,)), ((), ())),
                             preferred_element_type=f32) * logit_scale
    o_ref[...] = logits.astype(o_ref.dtype)


# --------------------------- JAX wrapper / glue ------------------------------

def _attention_constants(b, seq_len, d, n_head, dtype):
    """Trace-time constants: segment (batch) selection and channel->head masks."""
    seg = (np.arange(b * seq_len)[:, None] // seq_len
           == np.arange(b)[None, :]).astype(np.float32)                    # (bS, b)
    hm = (np.arange(d)[:, None] // (d // n_head)
          == np.arange(n_head)[None, :]).astype(np.float32)                # (d, H)
    return (jnp.asarray(seg, dtype), jnp.asarray(np.ascontiguousarray(seg.T), dtype),
            jnp.asarray(hm, dtype), jnp.asarray(np.ascontiguousarray(hm.T), dtype))


def _based_feature(p, ref_middle, text_features):
    b, f, l, d = ref_middle.shape
    assert l == 16, "m_remained expects a 4x4 spatial grid (l == 16)"
    assert d % NHEAD == 0

    # --- Kernel 1: m_remained 1x1 conv + ReLU -------------------------------
    # torch: ref_middle.reshape(b*f, -1, 4, 4) is a raw reshape -> (b*f, d, 16).
    x = ref_middle.reshape(b * f, d, l)
    x = jnp.transpose(x, (0, 2, 1)).reshape(b * f * l, d)       # rows = pixels
    y = pl.pallas_call(
        _conv_relu_kernel,
        out_shape=jax.ShapeDtypeStruct((b * f * l, d), ref_middle.dtype),
    )(x, p["m_remained_wt"], p["m_remained_b"])

    # Back to torch layout: (b*f, d, 16) -> raw reshape (b, f, l, d) -> raw reshape
    # (l*f, b, d) (the MHA sequence), then batch-major rows for the fused kernel.
    p_s_m = jnp.transpose(y.reshape(b * f, l, d), (0, 2, 1)).reshape(b, f, l, d)
    seq_len = l * f
    kv = jnp.transpose(p_s_m.reshape(seq_len, b, d), (1, 0, 2)).reshape(b * seq_len, d)

    seg, segt, hm, hmt = _attention_constants(b, seq_len, d, NHEAD, ref_middle.dtype)

    # --- Kernel 2: m_residual + ResidualAttentionBlock + ReLU ---------------
    return pl.pallas_call(
        functools.partial(_rab_kernel, n_head=NHEAD, seq_len=seq_len),
        out_shape=jax.ShapeDtypeStruct((b, d), text_features.dtype),
    )(text_features, kv, seg, segt, hm, hmt,
      p["m_residual_wt"], p["m_residual_b"],
      p["ln1_g"], p["ln1_b"],
      p["wq_t"], p["bq"], p["wk_t"], p["bk"], p["wv_t"], p["bv"],
      p["attn_out_wt"], p["attn_out_b"],
      p["ln2_g"], p["ln2_b"],
      p["mlp_fc_wt"], p["mlp_fc_b"],
      p["mlp_proj_wt"], p["mlp_proj_b"])


def combiner_forward(p, image_features, text_features, target_features,
                     logit_scale=100.0):
    ref_high, ref_middle = image_features
    b, d = text_features.shape

    based = _based_feature(p, ref_middle, text_features)        # (b, D)

    # time_process (mean over the time axis) — tiny XLA glue reductions.
    ref_high_m = jnp.mean(ref_high, axis=1)                     # (b, D)
    tgt_m = jnp.mean(target_features[0], axis=1)                # (Nt, D)
    n_t = tgt_m.shape[0]

    # --- Kernel 3: projection head + L2 norms + scaled logits ---------------
    return pl.pallas_call(
        functools.partial(_head_kernel, logit_scale=float(logit_scale)),
        out_shape=jax.ShapeDtypeStruct((b, n_t), text_features.dtype),
    )(text_features, ref_high_m, based, tgt_m,
      p["text_proj_wt"], p["text_proj_b"],
      p["image_proj_wt"], p["image_proj_b"],
      p["combiner_img_wt"], p["combiner_txt_wt"], p["combiner_b"],
      p["ds1_img_wt"], p["ds1_txt_wt"], p["ds1_b"],
      p["ds2_w_row"], p["ds2_b"],
      p["output_wt"], p["output_b"])


# ------------------------------- parameters ---------------------------------

def init_params(key, clip_feature_dim, projection_dim, hidden_dim):
    """Parameters in the original torch layouts (Linear weight: (out, in))."""
    D, P, Hd = clip_feature_dim, projection_dim, hidden_dim
    keys = iter(jax.random.split(key, 64))

    def lin(out_d, in_d):
        w = jax.random.normal(next(keys), (out_d, in_d), jnp.float32) / np.sqrt(in_d)
        b = 0.01 * jax.random.normal(next(keys), (out_d,), jnp.float32)
        return w, b

    p = {}
    p["text_proj_w"], p["text_proj_b"] = lin(P, D)
    p["image_proj_w"], p["image_proj_b"] = lin(P, D)
    p["combiner_w"], p["combiner_b"] = lin(Hd, 2 * P)
    p["output_w"], p["output_b"] = lin(D, Hd)
    p["ds1_w"], p["ds1_b"] = lin(Hd, 2 * P)
    p["ds2_w"], p["ds2_b"] = lin(1, Hd)
    p["m_remained_w"], p["m_remained_b"] = lin(D, D)      # Conv2d(D, D, 1x1) squeezed
    p["m_residual_w"], p["m_residual_b"] = lin(D, D)
    p["attn_in_w"], p["attn_in_b"] = lin(3 * D, D)        # MHA in_proj
    p["attn_out_w"], p["attn_out_b"] = lin(D, D)          # MHA out_proj
    p["ln1_g"] = jnp.ones((D,), jnp.float32)
    p["ln1_b"] = jnp.zeros((D,), jnp.float32)
    p["ln2_g"] = jnp.ones((D,), jnp.float32)
    p["ln2_b"] = jnp.zeros((D,), jnp.float32)
    p["mlp_fc_w"], p["mlp_fc_b"] = lin(4 * D, D)
    p["mlp_proj_w"], p["mlp_proj_b"] = lin(D, 4 * D)
    return p


def pack_params(p, clip_feature_dim, projection_dim):
    """One-time repack: transpose every weight to (K, N), split packed weights,
    and reshape biases/LN params to (1, N) — so no layout ops run per forward."""
    D, P = clip_feature_dim, projection_dim
    t = jnp.transpose
    row = lambda v: jnp.reshape(v, (1, -1))
    wi, bi = p["attn_in_w"], p["attn_in_b"]
    q = {
        "m_remained_wt": t(p["m_remained_w"]), "m_remained_b": row(p["m_remained_b"]),
        "m_residual_wt": t(p["m_residual_w"]), "m_residual_b": row(p["m_residual_b"]),
        "ln1_g": row(p["ln1_g"]), "ln1_b": row(p["ln1_b"]),
        "ln2_g": row(p["ln2_g"]), "ln2_b": row(p["ln2_b"]),
        "wq_t": t(wi[:D]), "bq": row(bi[:D]),
        "wk_t": t(wi[D:2 * D]), "bk": row(bi[D:2 * D]),
        "wv_t": t(wi[2 * D:]), "bv": row(bi[2 * D:]),
        "attn_out_wt": t(p["attn_out_w"]), "attn_out_b": row(p["attn_out_b"]),
        "mlp_fc_wt": t(p["mlp_fc_w"]), "mlp_fc_b": row(p["mlp_fc_b"]),
        "mlp_proj_wt": t(p["mlp_proj_w"]), "mlp_proj_b": row(p["mlp_proj_b"]),
        "text_proj_wt": t(p["text_proj_w"]), "text_proj_b": row(p["text_proj_b"]),
        "image_proj_wt": t(p["image_proj_w"]), "image_proj_b": row(p["image_proj_b"]),
        "combiner_b": row(p["combiner_b"]),
        "ds1_b": row(p["ds1_b"]),
        "ds2_w_row": jnp.reshape(p["ds2_w"], (1, -1)),
        "ds2_b": jnp.reshape(p["ds2_b"], (1, 1)),
        "output_wt": t(p["output_w"]), "output_b": row(p["output_b"]),
    }
    # combiner_layer / dynamic_scalar[0] consume cat(image_proj, text_proj):
    # pre-split their input (column) blocks so the concat never materializes.
    wc_t = t(p["combiner_w"])        # (2P, Hd)
    wd_t = t(p["ds1_w"])             # (2P, Hd)
    q["combiner_img_wt"], q["combiner_txt_wt"] = wc_t[:P], wc_t[P:]
    q["ds1_img_wt"], q["ds1_txt_wt"] = wd_t[:P], wd_t[P:]
    return q


# ----------------------------------- main ------------------------------------

if __name__ == "__main__":
    # clip_feature_dim must be divisible by nhead=8; l must be 16 (4x4 conv spatial).
    D, P, Hd = 32, 16, 48             # clip_feature_dim, projection_dim, hidden_dim
    b, f, l, T, Nt = 2, 2, 16, 3, 4

    key = jax.random.PRNGKey(0)
    k_param, k1, k2, k3, k4 = jax.random.split(key, 5)
    params = pack_params(init_params(k_param, D, P, Hd), D, P)

    ref_high = jax.random.normal(k1, (b, T, D), jnp.float32)               # high-level feats
    ref_middle = jax.random.normal(k2, (b, f, l, D), jnp.float32)          # middle-level feats
    text_features = jax.random.normal(k3, (b, D), jnp.float32)
    target_features = jax.random.normal(k4, (2, Nt, T, D), jnp.float32)    # [0] used

    fwd = jax.jit(combiner_forward)
    logits = fwd(params, (ref_high, ref_middle), text_features, target_features)
    jax.block_until_ready(logits)
    assert logits.shape == (b, Nt), logits.shape
    print("KERNEL_OK")
</pallas_src>

<mosaic_0001>
module attributes {stable_mosaic.version = 11 : i64} {
  func.func @_conv_relu_kernel(%arg0: memref<64x32xf32, #tpu.memory_space<vmem>>, %arg1: memref<32x32xf32, #tpu.memory_space<vmem>>, %arg2: memref<1x32xf32, #tpu.memory_space<vmem>>, %arg3: memref<64x32xf32, #tpu.memory_space<vmem>>) attributes {dimension_semantics = [], scalar_prefetch = 0 : i64, scratch_operands = 0 : i64, tpu.core_type = #tpu.core_type<tc>} {
    %c0 = arith.constant 0 : index
    %c0_0 = arith.constant 0 : index
    %0 = vector.load %arg0[%c0, %c0_0] : memref<64x32xf32, #tpu.memory_space<vmem>>, vector<64x32xf32>
    %c0_1 = arith.constant 0 : index
    %c0_2 = arith.constant 0 : index
    %1 = vector.load %arg1[%c0_1, %c0_2] : memref<32x32xf32, #tpu.memory_space<vmem>>, vector<32x32xf32>
    %cst = arith.constant dense<0.000000e+00> : vector<64x32xf32>
    %2 = tpu.matmul %0, %1, %cst {dimension_numbers = #tpu.dot_dimension_numbers<[1], [0], [0], [1], [0, 0, 1, 1], [], []>} : vector<64x32xf32>, vector<32x32xf32>, vector<64x32xf32> -> vector<64x32xf32>
    %c0_3 = arith.constant 0 : index
    %c0_4 = arith.constant 0 : index
    %3 = vector.load %arg2[%c0_3, %c0_4] : memref<1x32xf32, #tpu.memory_space<vmem>>, vector<1x32xf32>
    %4 = vector.broadcast %3 : vector<1x32xf32> to vector<64x32xf32>
    %5 = arith.addf %2, %4 : vector<64x32xf32>
    %cst_5 = arith.constant 0.000000e+00 : f32
    %6 = vector.broadcast %cst_5 : f32 to vector<64x32xf32>
    %7 = arith.maximumf %5, %6 : vector<64x32xf32>
    %c0_6 = arith.constant 0 : index
    %c0_7 = arith.constant 0 : index
    %8 = vector.load %arg3[%c0_6, %c0_7] : memref<64x32xf32, #tpu.memory_space<vmem>>, vector<64x32xf32>
    tpu.vector_store %arg3[%c0_6, %c0_7], %7 {strides = array<i32>} : memref<64x32xf32, #tpu.memory_space<vmem>>, vector<64x32xf32>,
    return
  }
}

module attributes {stable_mosaic.version = 11 : i64} {
  func.func @_rab_kernel(%arg0: memref<2x32xf32, #tpu.memory_space<vmem>>, %arg1: memref<64x32xf32, #tpu.memory_space<vmem>>, %arg2: memref<64x2xf32, #tpu.memory_space<vmem>>, %arg3: memref<2x64xf32, #tpu.memory_space<vmem>>, %arg4: memref<32x8xf32, #tpu.memory_space<vmem>>, %arg5: memref<8x32xf32, #tpu.memory_space<vmem>>, %arg6: memref<32x32xf32, #tpu.memory_space<vmem>>, %arg7: memref<1x32xf32, #tpu.memory_space<vmem>>, %arg8: memref<1x32xf32, #tpu.memory_space<vmem>>, %arg9: memref<1x32xf32, #tpu.memory_space<vmem>>, %arg10: memref<32x32xf32, #tpu.memory_space<vmem>>, %arg11: memref<1x32xf32, #tpu.memory_space<vmem>>, %arg12: memref<32x32xf32, #tpu.memory_space<vmem>>, %arg13: memref<1x32xf32, #tpu.memory_space<vmem>>, %arg14: memref<32x32xf32, #tpu.memory_space<vmem>>, %arg15: memref<1x32xf32, #tpu.memory_space<vmem>>, %arg16: memref<32x32xf32, #tpu.memory_space<vmem>>, %arg17: memref<1x32xf32, #tpu.memory_space<vmem>>, %arg18: memref<1x32xf32, #tpu.memory_space<vmem>>, %arg19: memref<1x32xf32, #tpu.memory_space<vmem>>, %arg20: memref<32x128xf32, #tpu.memory_space<vmem>>, %arg21: memref<1x128xf32, #tpu.memory_space<vmem>>, %arg22: memref<128x32xf32, #tpu.memory_space<vmem>>, %arg23: memref<1x32xf32, #tpu.memory_space<vmem>>, %arg24: memref<2x32xf32, #tpu.memory_space<vmem>>) attributes {dimension_semantics = [], scalar_prefetch = 0 : i64, scratch_operands = 0 : i64, tpu.core_type = #tpu.core_type<tc>} {
    %c0 = arith.constant 0 : index
    %c0_0 = arith.constant 0 : index
    %0 = vector.load %arg0[%c0, %c0_0] : memref<2x32xf32, #tpu.memory_space<vmem>>, vector<2x32xf32>
    %c0_1 = arith.constant 0 : index
    %c0_2 = arith.constant 0 : index
    %1 = vector.load %arg1[%c0_1, %c0_2] : memref<64x32xf32, #tpu.memory_space<vmem>>, vector<64x32xf32>
    %c0_3 = arith.constant 0 : index
    %c0_4 = arith.constant 0 : index
    %2 = vector.load %arg2[%c0_3, %c0_4] : memref<64x2xf32, #tpu.memory_space<vmem>>, vector<64x2xf32>
    %c0_5 = arith.constant 0 : index
    %c0_6 = arith.constant 0 : index
    %3 = vector.load %arg3[%c0_5, %c0_6] : memref<2x64xf32, #tpu.memory_space<vmem>>, vector<2x64xf32>
    %c0_7 = arith.constant 0 : index
    %c0_8 = arith.constant 0 : index
    %4 = vector.load %arg4[%c0_7, %c0_8] : memref<32x8xf32, #tpu.memory_space<vmem>>, vector<32x8xf32>
    %c0_9 = arith.constant 0 : index
    %c0_10 = arith.constant 0 : index
    %5 = vector.load %arg5[%c0_9, %c0_10] : memref<8x32xf32, #tpu.memory_space<vmem>>, vector<8x32xf32>
    %c0_11 = arith.constant 0 : index
    %c0_12 = arith.constant 0 : index
    %6 = vector.load %arg6[%c0_11, %c0_12] : memref<32x32xf32, #tpu.memory_space<vmem>>, vector<32x32xf32>
    %cst = arith.constant dense<0.000000e+00> : vector<2x32xf32>
    %7 = tpu.matmul %0, %6, %cst {dimension_numbers = #tpu.dot_dimension_numbers<[1], [0], [0], [1], [0, 0, 1, 1], [], []>} : vector<2x32xf32>, vector<32x32xf32>, vector<2x32xf32> -> vector<2x32xf32>
    %c0_13 = arith.constant 0 : index
    %c0_14 = arith.constant 0 : index
    %8 = vector.load %arg7[%c0_13, %c0_14] : memref<1x32xf32, #tpu.memory_space<vmem>>, vector<1x32xf32>
    %9 = vector.broadcast %8 : vector<1x32xf32> to vector<2x32xf32>
    %10 = arith.addf %7, %9 : vector<2x32xf32>
    %cst_15 = arith.constant 0.000000e+00 : f32
    %11 = vector.broadcast %cst_15 : f32 to vector<2x32xf32>
    %12 = arith.maximumf %10, %11 : vector<2x32xf32>
    %c0_16 = arith.constant 0 : index
    %c0_17 = arith.constant 0 : index
    %13 = vector.load %arg8[%c0_16, %c0_17] : memref<1x32xf32, #tpu.memory_space<vmem>>, vector<1x32xf32>
    %c0_18 = arith.constant 0 : index
    %c0_19 = arith.constant 0 : index
    %14 = vector.load %arg9[%c0_18, %c0_19] : memref<1x32xf32, #tpu.memory_space<vmem>>, vector<1x32xf32>
    %cst_20 = arith.constant dense<0.000000e+00> : vector<2xf32>
    %15 = vector.multi_reduction <add>, %12, %cst_20 [1] : vector<2x32xf32> to vector<2xf32>
    %16 = vector.shape_cast %15 : vector<2xf32> to vector<2x1xf32>
    %cst_21 = arith.constant 3.200000e+01 : f32
    %17 = vector.broadcast %cst_21 : f32 to vector<2x1xf32>
    %18 = arith.divf %16, %17 : vector<2x1xf32>
    %19 = vector.broadcast %18 : vector<2x1xf32> to vector<2x32xf32>
    %20 = arith.subf %12, %19 : vector<2x32xf32>
    %21 = arith.mulf %20, %20 : vector<2x32xf32>
    %cst_22 = arith.constant dense<0.000000e+00> : vector<2xf32>
    %22 = vector.multi_reduction <add>, %21, %cst_22 [1] : vector<2x32xf32> to vector<2xf32>
    %23 = vector.shape_cast %22 : vector<2xf32> to vector<2x1xf32>
    %cst_23 = arith.constant 3.200000e+01 : f32
    %24 = vector.broadcast %cst_23 : f32 to vector<2x1xf32>
    %25 = arith.divf %23, %24 : vector<2x1xf32>
    %cst_24 = arith.constant 9.99999974E-6 : f32
    %26 = vector.broadcast %cst_24 : f32 to vector<2x1xf32>
    %27 = arith.addf %25, %26 : vector<2x1xf32>
    %28 = math.rsqrt %27 : vector<2x1xf32>
    %29 = vector.broadcast %28 : vector<2x1xf32> to vector<2x32xf32>
    %30 = arith.mulf %20, %29 : vector<2x32xf32>
    %31 = vector.broadcast %13 : vector<1x32xf32> to vector<2x32xf32>
    %32 = arith.mulf %30, %31 : vector<2x32xf32>
    %33 = vector.broadcast %14 : vector<1x32xf32> to vector<2x32xf32>
    %34 = arith.addf %32, %33 : vector<2x32xf32>
    %cst_25 = arith.constant dense<0.000000e+00> : vector<64xf32>
    %35 = vector.multi_reduction <add>, %1, %cst_25 [1] : vector<64x32xf32> to vector<64xf32>
    %36 = vector.shape_cast %35 : vector<64xf32> to vector<64x1xf32>
    %cst_26 = arith.constant 3.200000e+01 : f32
    %37 = vector.broadcast %cst_26 : f32 to vector<64x1xf32>
    %38 = arith.divf %36, %37 : vector<64x1xf32>
    %39 = vector.broadcast %38 : vector<64x1xf32> to vector<64x32xf32>
    %40 = arith.subf %1, %39 : vector<64x32xf32>
    %41 = arith.mulf %40, %40 : vector<64x32xf32>
    %cst_27 = arith.constant dense<0.000000e+00> : vector<64xf32>
    %42 = vector.multi_reduction <add>, %41, %cst_27 [1] : vector<64x32xf32> to vector<64xf32>
    %43 = vector.shape_cast %42 : vector<64xf32> to vector<64x1xf32>
    %cst_28 = arith.constant 3.200000e+01 : f32
    %44 = vector.broadcast %cst_28 : f32 to vector<64x1xf32>
    %45 = arith.divf %43, %44 : vector<64x1xf32>
    %cst_29 = arith.constant 9.99999974E-6 : f32
    %46 = vector.broadcast %cst_29 : f32 to vector<64x1xf32>
    %47 = arith.addf %45, %46 : vector<64x1xf32>
    %48 = math.rsqrt %47 : vector<64x1xf32>
    %49 = vector.broadcast %48 : vector<64x1xf32> to vector<64x32xf32>
    %50 = arith.mulf %40, %49 : vector<64x32xf32>
    %51 = vector.broadcast %13 : vector<1x32xf32> to vector<64x32xf32>
    %52 = arith.mulf %50, %51 : vector<64x32xf32>
    %53 = vector.broadcast %14 : vector<1x32xf32> to vector<64x32xf32>
    %54 = arith.addf %52, %53 : vector<64x32xf32>
    %c0_30 = arith.constant 0 : index
    %c0_31 = arith.constant 0 : index
    %55 = vector.load %arg10[%c0_30, %c0_31] : memref<32x32xf32, #tpu.memory_space<vmem>>, vector<32x32xf32>
    %cst_32 = arith.constant dense<0.000000e+00> : vector<2x32xf32>
    %56 = tpu.matmul %34, %55, %cst_32 {dimension_numbers = #tpu.dot_dimension_numbers<[1], [0], [0], [1], [0, 0, 1, 1], [], []>} : vector<2x32xf32>, vector<32x32xf32>, vector<2x32xf32> -> vector<2x32xf32>
    %c0_33 = arith.constant 0 : index
    %c0_34 = arith.constant 0 : index
    %57 = vector.load %arg11[%c0_33, %c0_34] : memref<1x32xf32, #tpu.memory_space<vmem>>, vector<1x32xf32>
    %58 = vector.broadcast %57 : vector<1x32xf32> to vector<2x32xf32>
    %59 = arith.addf %56, %58 : vector<2x32xf32>
    %cst_35 = arith.constant 5.000000e-01 : f32
    %60 = vector.broadcast %cst_35 : f32 to vector<2x32xf32>
    %61 = arith.mulf %59, %60 : vector<2x32xf32>
    %c0_36 = arith.constant 0 : index
    %c0_37 = arith.constant 0 : index
    %62 = vector.load %arg12[%c0_36, %c0_37] : memref<32x32xf32, #tpu.memory_space<vmem>>, vector<32x32xf32>
    %cst_38 = arith.constant dense<0.000000e+00> : vector<64x32xf32>
    %63 = tpu.matmul %54, %62, %cst_38 {dimension_numbers = #tpu.dot_dimension_numbers<[1], [0], [0], [1], [0, 0, 1, 1], [], []>} : vector<64x32xf32>, vector<32x32xf32>, vector<64x32xf32> -> vector<64x32xf32>
    %c0_39 = arith.constant 0 : index
    %c0_40 = arith.constant 0 : index
    %64 = vector.load %arg13[%c0_39, %c0_40] : memref<1x32xf32, #tpu.memory_space<vmem>>, vector<1x32xf32>
    %65 = vector.broadcast %64 : vector<1x32xf32> to vector<64x32xf32>
    %66 = arith.addf %63, %65 : vector<64x32xf32>
    %c0_41 = arith.constant 0 : index
    %c0_42 = arith.constant 0 : index
    %67 = vector.load %arg14[%c0_41, %c0_42] : memref<32x32xf32, #tpu.memory_space<vmem>>, vector<32x32xf32>
    %cst_43 = arith.constant dense<0.000000e+00> : vector<64x32xf32>
    %68 = tpu.matmul %54, %67, %cst_43 {dimension_numbers = #tpu.dot_dimension_numbers<[1], [0], [0], [1], [0, 0, 1, 1], [], []>} : vector<64x32xf32>, vector<32x32xf32>, vector<64x32xf32> -> vector<64x32xf32>
    %c0_44 = arith.constant 0 : index
    %c0_45 = arith.constant 0 : index
    %69 = vector.load %arg15[%c0_44, %c0_45] : memref<1x32xf32, #tpu.memory_space<vmem>>, vector<1x32xf32>
    %70 = vector.broadcast %69 : vector<1x32xf32> to vector<64x32xf32>
    %71 = arith.addf %68, %70 : vector<64x32xf32>
    %cst_46 = arith.constant dense<0.000000e+00> : vector<64x32xf32>
    %72 = tpu.matmul %2, %61, %cst_46 {dimension_numbers = #tpu.dot_dimension_numbers<[1], [0], [0], [1], [0, 0, 1, 1], [], []>} : vector<64x2xf32>, vector<2x32xf32>, vector<64x32xf32> -> vector<64x32xf32>
    %73 = arith.mulf %72, %66 : vector<64x32xf32>
    %cst_47 = arith.constant dense<0.000000e+00> : vector<64x8xf32>
    %74 = tpu.matmul %73, %4, %cst_47 {dimension_numbers = #tpu.dot_dimension_numbers<[1], [0], [0], [1], [0, 0, 1, 1], [], []>} : vector<64x32xf32>, vector<32x8xf32>, vector<64x8xf32> -> vector<64x8xf32>
    %cst_48 = arith.constant dense<0xFF800000> : vector<8xf32>
    %75 = vector.multi_reduction <maximumf>, %74, %cst_48 [0] : vector<64x8xf32> to vector<8xf32>
    %76 = vector.shape_cast %75 : vector<8xf32> to vector<1x8xf32>
    %77 = vector.broadcast %76 : vector<1x8xf32> to vector<64x8xf32>
    %78 = arith.subf %74, %77 : vector<64x8xf32>
    %79 = math.exp %78 : vector<64x8xf32>
    %cst_49 = arith.constant dense<0.000000e+00> : vector<2x8xf32>
    %80 = tpu.matmul %3, %79, %cst_49 {dimension_numbers = #tpu.dot_dimension_numbers<[1], [0], [0], [1], [0, 0, 1, 1], [], []>} : vector<2x64xf32>, vector<64x8xf32>, vector<2x8xf32> -> vector<2x8xf32>
    %81 = tpu.reciprocal %80 {approx = true} : vector<2x8xf32> -> vector<2x8xf32>
    %cst_50 = arith.constant dense<0.000000e+00> : vector<64x8xf32>
    %82 = tpu.matmul %2, %81, %cst_50 {dimension_numbers = #tpu.dot_dimension_numbers<[1], [0], [0], [1], [0, 0, 1, 1], [], []>} : vector<64x2xf32>, vector<2x8xf32>, vector<64x8xf32> -> vector<64x8xf32>
    %83 = arith.mulf %79, %82 : vector<64x8xf32>
    %cst_51 = arith.constant dense<0.000000e+00> : vector<64x32xf32>
    %84 = tpu.matmul %83, %5, %cst_51 {dimension_numbers = #tpu.dot_dimension_numbers<[1], [0], [0], [1], [0, 0, 1, 1], [], []>} : vector<64x8xf32>, vector<8x32xf32>, vector<64x32xf32> -> vector<64x32xf32>
    %85 = arith.mulf %84, %71 : vector<64x32xf32>
    %cst_52 = arith.constant dense<0.000000e+00> : vector<2x32xf32>
    %86 = tpu.matmul %3, %85, %cst_52 {dimension_numbers = #tpu.dot_dimension_numbers<[1], [0], [0], [1], [0, 0, 1, 1], [], []>} : vector<2x64xf32>, vector<64x32xf32>, vector<2x32xf32> -> vector<2x32xf32>
    %c0_53 = arith.constant 0 : index
    %c0_54 = arith.constant 0 : index
    %87 = vector.load %arg16[%c0_53, %c0_54] : memref<32x32xf32, #tpu.memory_space<vmem>>, vector<32x32xf32>
    %cst_55 = arith.constant dense<0.000000e+00> : vector<2x32xf32>
    %88 = tpu.matmul %86, %87, %cst_55 {dimension_numbers = #tpu.dot_dimension_numbers<[1], [0], [0], [1], [0, 0, 1, 1], [], []>} : vector<2x32xf32>, vector<32x32xf32>, vector<2x32xf32> -> vector<2x32xf32>
    %c0_56 = arith.constant 0 : index
    %c0_57 = arith.constant 0 : index
    %89 = vector.load %arg17[%c0_56, %c0_57] : memref<1x32xf32, #tpu.memory_space<vmem>>, vector<1x32xf32>
    %90 = vector.broadcast %89 : vector<1x32xf32> to vector<2x32xf32>
    %91 = arith.addf %88, %90 : vector<2x32xf32>
    %cst_58 = arith.constant dense<0.000000e+00> : vector<2x32xf32>
    %92 = tpu.matmul %3, %1, %cst_58 {dimension_numbers = #tpu.dot_dimension_numbers<[1], [0], [0], [1], [0, 0, 1, 1], [], []>} : vector<2x64xf32>, vector<64x32xf32>, vector<2x32xf32> -> vector<2x32xf32>
    %cst_59 = arith.constant 3.125000e-02 : f32
    %93 = vector.broadcast %cst_59 : f32 to vector<2x32xf32>
    %94 = arith.mulf %92, %93 : vector<2x32xf32>
    %95 = arith.addf %94, %91 : vector<2x32xf32>
    %c0_60 = arith.constant 0 : index
    %c0_61 = arith.constant 0 : index
    %96 = vector.load %arg18[%c0_60, %c0_61] : memref<1x32xf32, #tpu.memory_space<vmem>>, vector<1x32xf32>
    %c0_62 = arith.constant 0 : index
    %c0_63 = arith.constant 0 : index
    %97 = vector.load %arg19[%c0_62, %c0_63] : memref<1x32xf32, #tpu.memory_space<vmem>>, vector<1x32xf32>
    %cst_64 = arith.constant dense<0.000000e+00> : vector<2xf32>
    %98 = vector.multi_reduction <add>, %95, %cst_64 [1] : vector<2x32xf32> to vector<2xf32>
    %99 = vector.shape_cast %98 : vector<2xf32> to vector<2x1xf32>
    %cst_65 = arith.constant 3.200000e+01 : f32
    %100 = vector.broadcast %cst_65 : f32 to vector<2x1xf32>
    %101 = arith.divf %99, %100 : vector<2x1xf32>
    %102 = vector.broadcast %101 : vector<2x1xf32> to vector<2x32xf32>
    %103 = arith.subf %95, %102 : vector<2x32xf32>
    %104 = arith.mulf %103, %103 : vector<2x32xf32>
    %cst_66 = arith.constant dense<0.000000e+00> : vector<2xf32>
    %105 = vector.multi_reduction <add>, %104, %cst_66 [1] : vector<2x32xf32> to vector<2xf32>
    %106 = vector.shape_cast %105 : vector<2xf32> to vector<2x1xf32>
    %cst_67 = arith.constant 3.200000e+01 : f32
    %107 = vector.broadcast %cst_67 : f32 to vector<2x1xf32>
    %108 = arith.divf %106, %107 : vector<2x1xf32>
    %cst_68 = arith.constant 9.99999974E-6 : f32
    %109 = vector.broadcast %cst_68 : f32 to vector<2x1xf32>
    %110 = arith.addf %108, %109 : vector<2x1xf32>
    %111 = math.rsqrt %110 : vector<2x1xf32>
    %112 = vector.broadcast %111 : vector<2x1xf32> to vector<2x32xf32>
    %113 = arith.mulf %103, %112 : vector<2x32xf32>
    %114 = vector.broadcast %96 : vector<1x32xf32> to vector<2x32xf32>
    %115 = arith.mulf %113, %114 : vector<2x32xf32>
    %116 = vector.broadcast %97 : vector<1x32xf32> to vector<2x32xf32>
    %117 = arith.addf %115, %116 : vector<2x32xf32>
    %c0_69 = arith.constant 0 : index
    %c0_70 = arith.constant 0 : index
    %118 = vector.load %arg20[%c0_69, %c0_70] : memref<32x128xf32, #tpu.memory_space<vmem>>, vector<32x128xf32>
    %cst_71 = arith.constant dense<0.000000e+00> : vector<2x128xf32>
    %119 = tpu.matmul %117, %118, %cst_71 {dimension_numbers = #tpu.dot_dimension_numbers<[1], [0], [0], [1], [0, 0, 1, 1], [], []>} : vector<2x32xf32>, vector<32x128xf32>, vector<2x128xf32> -> vector<2x128xf32>
    %c0_72 = arith.constant 0 : index
    %c0_73 = arith.constant 0 : index
    %120 = vector.load %arg21[%c0_72, %c0_73] : memref<1x128xf32, #tpu.memory_space<vmem>>, vector<1x128xf32>
    %121 = vector.broadcast %120 : vector<1x128xf32> to vector<2x128xf32>
    %122 = arith.addf %119, %121 : vector<2x128xf32>
    %cst_74 = arith.constant 1.702000e+00 : f32
    %123 = vector.broadcast %cst_74 : f32 to vector<2x128xf32>
    %124 = arith.mulf %123, %122 : vector<2x128xf32>
    %125 = arith.negf %124 : vector<2x128xf32>
    %126 = math.exp %125 : vector<2x128xf32>
    %cst_75 = arith.constant 1.000000e+00 : f32
    %127 = vector.broadcast %cst_75 : f32 to vector<2x128xf32>
    %128 = arith.addf %127, %126 : vector<2x128xf32>
    %129 = arith.divf %127, %128 : vector<2x128xf32>
    %130 = arith.mulf %122, %129 : vector<2x128xf32>
    %c0_76 = arith.constant 0 : index
    %c0_77 = arith.constant 0 : index
    %131 = vector.load %arg22[%c0_76, %c0_77] : memref<128x32xf32, #tpu.memory_space<vmem>>, vector<128x32xf32>
    %cst_78 = arith.constant dense<0.000000e+00> : vector<2x32xf32>
    %132 = tpu.matmul %130, %131, %cst_78 {dimension_numbers = #tpu.dot_dimension_numbers<[1], [0], [0], [1], [0, 0, 1, 1], [], []>} : vector<2x128xf32>, vector<128x32xf32>, vector<2x32xf32> -> vector<2x32xf32>
    %133 = arith.addf %95, %132 : vector<2x32xf32>
    %c0_79 = arith.constant 0 : index
    %c0_80 = arith.constant 0 : index
    %134 = vector.load %arg23[%c0_79, %c0_80] : memref<1x32xf32, #tpu.memory_space<vmem>>, vector<1x32xf32>
    %135 = vector.broadcast %134 : vector<1x32xf32> to vector<2x32xf32>
    %136 = arith.addf %133, %135 : vector<2x32xf32>
    %cst_81 = arith.constant 0.000000e+00 : f32
    %137 = vector.broadcast %cst_81 : f32 to vector<2x32xf32>
    %138 = arith.maximumf %136, %137 : vector<2x32xf32>
    %c0_82 = arith.constant 0 : index
    %c0_83 = arith.constant 0 : index
    %139 = vector.load %arg24[%c0_82, %c0_83] : memref<2x32xf32, #tpu.memory_space<vmem>>, vector<2x32xf32>
    tpu.vector_store %arg24[%c0_82, %c0_83], %138 {strides = array<i32>} : memref<2x32xf32, #tpu.memory_space<vmem>>, vector<2x32xf32>,
    return
  }
}

module attributes {stable_mosaic.version = 11 : i64} {
  func.func @_head_kernel(%arg0: memref<2x32xf32, #tpu.memory_space<vmem>>, %arg1: memref<2x32xf32, #tpu.memory_space<vmem>>, %arg2: memref<2x32xf32, #tpu.memory_space<vmem>>, %arg3: memref<4x32xf32, #tpu.memory_space<vmem>>, %arg4: memref<32x16xf32, #tpu.memory_space<vmem>>, %arg5: memref<1x16xf32, #tpu.memory_space<vmem>>, %arg6: memref<32x16xf32, #tpu.memory_space<vmem>>, %arg7: memref<1x16xf32, #tpu.memory_space<vmem>>, %arg8: memref<16x48xf32, #tpu.memory_space<vmem>>, %arg9: memref<16x48xf32, #tpu.memory_space<vmem>>, %arg10: memref<1x48xf32, #tpu.memory_space<vmem>>, %arg11: memref<16x48xf32, #tpu.memory_space<vmem>>, %arg12: memref<16x48xf32, #tpu.memory_space<vmem>>, %arg13: memref<1x48xf32, #tpu.memory_space<vmem>>, %arg14: memref<1x48xf32, #tpu.memory_space<vmem>>, %arg15: memref<1x1xf32, #tpu.memory_space<vmem>>, %arg16: memref<48x32xf32, #tpu.memory_space<vmem>>, %arg17: memref<1x32xf32, #tpu.memory_space<vmem>>, %arg18: memref<2x4xf32, #tpu.memory_space<vmem>>) attributes {dimension_semantics = [], scalar_prefetch = 0 : i64, scratch_operands = 0 : i64, tpu.core_type = #tpu.core_type<tc>} {
    %c0 = arith.constant 0 : index
    %c0_0 = arith.constant 0 : index
    %0 = vector.load %arg0[%c0, %c0_0] : memref<2x32xf32, #tpu.memory_space<vmem>>, vector<2x32xf32>
    %c0_1 = arith.constant 0 : index
    %c0_2 = arith.constant 0 : index
    %1 = vector.load %arg1[%c0_1, %c0_2] : memref<2x32xf32, #tpu.memory_space<vmem>>, vector<2x32xf32>
    %c0_3 = arith.constant 0 : index
    %c0_4 = arith.constant 0 : index
    %2 = vector.load %arg2[%c0_3, %c0_4] : memref<2x32xf32, #tpu.memory_space<vmem>>, vector<2x32xf32>
    %c0_5 = arith.constant 0 : index
    %c0_6 = arith.constant 0 : index
    %3 = vector.load %arg4[%c0_5, %c0_6] : memref<32x16xf32, #tpu.memory_space<vmem>>, vector<32x16xf32>
    %cst = arith.constant dense<0.000000e+00> : vector<2x16xf32>
    %4 = tpu.matmul %0, %3, %cst {dimension_numbers = #tpu.dot_dimension_numbers<[1], [0], [0], [1], [0, 0, 1, 1], [], []>} : vector<2x32xf32>, vector<32x16xf32>, vector<2x16xf32> -> vector<2x16xf32>
    %c0_7 = arith.constant 0 : index
    %c0_8 = arith.constant 0 : index
    %5 = vector.load %arg5[%c0_7, %c0_8] : memref<1x16xf32, #tpu.memory_space<vmem>>, vector<1x16xf32>
    %6 = vector.broadcast %5 : vector<1x16xf32> to vector<2x16xf32>
    %7 = arith.addf %4, %6 : vector<2x16xf32>
    %cst_9 = arith.constant 0.000000e+00 : f32
    %8 = vector.broadcast %cst_9 : f32 to vector<2x16xf32>
    %9 = arith.maximumf %7, %8 : vector<2x16xf32>
    %c0_10 = arith.constant 0 : index
    %c0_11 = arith.constant 0 : index
    %10 = vector.load %arg6[%c0_10, %c0_11] : memref<32x16xf32, #tpu.memory_space<vmem>>, vector<32x16xf32>
    %cst_12 = arith.constant dense<0.000000e+00> : vector<2x16xf32>
    %11 = tpu.matmul %1, %10, %cst_12 {dimension_numbers = #tpu.dot_dimension_numbers<[1], [0], [0], [1], [0, 0, 1, 1], [], []>} : vector<2x32xf32>, vector<32x16xf32>, vector<2x16xf32> -> vector<2x16xf32>
    %c0_13 = arith.constant 0 : index
    %c0_14 = arith.constant 0 : index
    %12 = vector.load %arg7[%c0_13, %c0_14] : memref<1x16xf32, #tpu.memory_space<vmem>>, vector<1x16xf32>
    %13 = vector.broadcast %12 : vector<1x16xf32> to vector<2x16xf32>
    %14 = arith.addf %11, %13 : vector<2x16xf32>
    %cst_15 = arith.constant 0.000000e+00 : f32
    %15 = vector.broadcast %cst_15 : f32 to vector<2x16xf32>
    %16 = arith.maximumf %14, %15 : vector<2x16xf32>
    %c0_16 = arith.constant 0 : index
    %c0_17 = arith.constant 0 : index
    %17 = vector.load %arg8[%c0_16, %c0_17] : memref<16x48xf32, #tpu.memory_space<vmem>>, vector<16x48xf32>
    %cst_18 = arith.constant dense<0.000000e+00> : vector<2x48xf32>
    %18 = tpu.matmul %16, %17, %cst_18 {dimension_numbers = #tpu.dot_dimension_numbers<[1], [0], [0], [1], [0, 0, 1, 1], [], []>} : vector<2x16xf32>, vector<16x48xf32>, vector<2x48xf32> -> vector<2x48xf32>
    %c0_19 = arith.constant 0 : index
    %c0_20 = arith.constant 0 : index
    %19 = vector.load %arg9[%c0_19, %c0_20] : memref<16x48xf32, #tpu.memory_space<vmem>>, vector<16x48xf32>
    %cst_21 = arith.constant dense<0.000000e+00> : vector<2x48xf32>
    %20 = tpu.matmul %9, %19, %cst_21 {dimension_numbers = #tpu.dot_dimension_numbers<[1], [0], [0], [1], [0, 0, 1, 1], [], []>} : vector<2x16xf32>, vector<16x48xf32>, vector<2x48xf32> -> vector<2x48xf32>
    %21 = arith.addf %18, %20 : vector<2x48xf32>
    %c0_22 = arith.constant 0 : index
    %c0_23 = arith.constant 0 : index
    %22 = vector.load %arg10[%c0_22, %c0_23] : memref<1x48xf32, #tpu.memory_space<vmem>>, vector<1x48xf32>
    %23 = vector.broadcast %22 : vector<1x48xf32> to vector<2x48xf32>
    %24 = arith.addf %21, %23 : vector<2x48xf32>
    %cst_24 = arith.constant 0.000000e+00 : f32
    %25 = vector.broadcast %cst_24 : f32 to vector<2x48xf32>
    %26 = arith.maximumf %24, %25 : vector<2x48xf32>
    %c0_25 = arith.constant 0 : index
    %c0_26 = arith.constant 0 : index
    %27 = vector.load %arg11[%c0_25, %c0_26] : memref<16x48xf32, #tpu.memory_space<vmem>>, vector<16x48xf32>
    %cst_27 = arith.constant dense<0.000000e+00> : vector<2x48xf32>
    %28 = tpu.matmul %16, %27, %cst_27 {dimension_numbers = #tpu.dot_dimension_numbers<[1], [0], [0], [1], [0, 0, 1, 1], [], []>} : vector<2x16xf32>, vector<16x48xf32>, vector<2x48xf32> -> vector<2x48xf32>
    %c0_28 = arith.constant 0 : index
    %c0_29 = arith.constant 0 : index
    %29 = vector.load %arg12[%c0_28, %c0_29] : memref<16x48xf32, #tpu.memory_space<vmem>>, vector<16x48xf32>
    %cst_30 = arith.constant dense<0.000000e+00> : vector<2x48xf32>
    %30 = tpu.matmul %9, %29, %cst_30 {dimension_numbers = #tpu.dot_dimension_numbers<[1], [0], [0], [1], [0, 0, 1, 1], [], []>} : vector<2x16xf32>, vector<16x48xf32>, vector<2x48xf32> -> vector<2x48xf32>
    %31 = arith.addf %28, %30 : vector<2x48xf32>
    %c0_31 = arith.constant 0 : index
    %c0_32 = arith.constant 0 : index
    %32 = vector.load %arg13[%c0_31, %c0_32] : memref<1x48xf32, #tpu.memory_space<vmem>>, vector<1x48xf32>
    %33 = vector.broadcast %32 : vector<1x48xf32> to vector<2x48xf32>
    %34 = arith.addf %31, %33 : vector<2x48xf32>
    %cst_33 = arith.constant 0.000000e+00 : f32
    %35 = vector.broadcast %cst_33 : f32 to vector<2x48xf32>
    %36 = arith.maximumf %34, %35 : vector<2x48xf32>
    %c0_34 = arith.constant 0 : index
    %c0_35 = arith.constant 0 : index
    %37 = vector.load %arg14[%c0_34, %c0_35] : memref<1x48xf32, #tpu.memory_space<vmem>>, vector<1x48xf32>
    %38 = vector.broadcast %37 : vector<1x48xf32> to vector<2x48xf32>
    %39 = arith.mulf %36, %38 : vector<2x48xf32>
    %cst_36 = arith.constant dense<0.000000e+00> : vector<2xf32>
    %40 = vector.multi_reduction <add>, %39, %cst_36 [1] : vector<2x48xf32> to vector<2xf32>
    %41 = vector.shape_cast %40 : vector<2xf32> to vector<2x1xf32>
    %c0_37 = arith.constant 0 : index
    %c0_38 = arith.constant 0 : index
    %42 = vector.load %arg15[%c0_37, %c0_38] : memref<1x1xf32, #tpu.memory_space<vmem>>, vector<1x1xf32>
    %43 = vector.broadcast %42 : vector<1x1xf32> to vector<2x1xf32>
    %44 = arith.addf %41, %43 : vector<2x1xf32>
    %45 = arith.negf %44 : vector<2x1xf32>
    %46 = math.exp %45 : vector<2x1xf32>
    %cst_39 = arith.constant 1.000000e+00 : f32
    %47 = vector.broadcast %cst_39 : f32 to vector<2x1xf32>
    %48 = arith.addf %47, %46 : vector<2x1xf32>
    %49 = arith.divf %47, %48 : vector<2x1xf32>
    %c0_40 = arith.constant 0 : index
    %c0_41 = arith.constant 0 : index
    %50 = vector.load %arg16[%c0_40, %c0_41] : memref<48x32xf32, #tpu.memory_space<vmem>>, vector<48x32xf32>
    %cst_42 = arith.constant dense<0.000000e+00> : vector<2x32xf32>
    %51 = tpu.matmul %26, %50, %cst_42 {dimension_numbers = #tpu.dot_dimension_numbers<[1], [0], [0], [1], [0, 0, 1, 1], [], []>} : vector<2x48xf32>, vector<48x32xf32>, vector<2x32xf32> -> vector<2x32xf32>
    %c0_43 = arith.constant 0 : index
    %c0_44 = arith.constant 0 : index
    %52 = vector.load %arg17[%c0_43, %c0_44] : memref<1x32xf32, #tpu.memory_space<vmem>>, vector<1x32xf32>
    %53 = vector.broadcast %52 : vector<1x32xf32> to vector<2x32xf32>
    %54 = arith.addf %51, %53 : vector<2x32xf32>
    %55 = vector.broadcast %49 : vector<2x1xf32> to vector<2x32xf32>
    %56 = arith.mulf %55, %0 : vector<2x32xf32>
    %57 = arith.addf %54, %56 : vector<2x32xf32>
    %cst_45 = arith.constant 1.000000e+00 : f32
    %58 = vector.broadcast %cst_45 : f32 to vector<2x1xf32>
    %59 = arith.subf %58, %49 : vector<2x1xf32>
    %60 = vector.broadcast %59 : vector<2x1xf32> to vector<2x32xf32>
    %61 = arith.mulf %60, %1 : vector<2x32xf32>
    %62 = arith.addf %57, %61 : vector<2x32xf32>
    %63 = arith.addf %62, %2 : vector<2x32xf32>
    %64 = arith.mulf %63, %63 : vector<2x32xf32>
    %cst_46 = arith.constant dense<0.000000e+00> : vector<2xf32>
    %65 = vector.multi_reduction <add>, %64, %cst_46 [1] : vector<2x32xf32> to vector<2xf32>
    %66 = vector.shape_cast %65 : vector<2xf32> to vector<2x1xf32>
    %cst_47 = arith.constant 1.000000e-24 : f32
    %67 = vector.broadcast %cst_47 : f32 to vector<2x1xf32>
    %68 = arith.maximumf %66, %67 : vector<2x1xf32>
    %69 = math.rsqrt %68 : vector<2x1xf32>
    %70 = vector.broadcast %69 : vector<2x1xf32> to vector<2x32xf32>
    %71 = arith.mulf %63, %70 : vector<2x32xf32>
    %c0_48 = arith.constant 0 : index
    %c0_49 = arith.constant 0 : index
    %72 = vector.load %arg3[%c0_48, %c0_49] : memref<4x32xf32, #tpu.memory_space<vmem>>, vector<4x32xf32>
    %73 = arith.mulf %72, %72 : vector<4x32xf32>
    %cst_50 = arith.constant dense<0.000000e+00> : vector<4xf32>
    %74 = vector.multi_reduction <add>, %73, %cst_50 [1] : vector<4x32xf32> to vector<4xf32>
    %75 = vector.shape_cast %74 : vector<4xf32> to vector<4x1xf32>
    %cst_51 = arith.constant 1.000000e-24 : f32
    %76 = vector.broadcast %cst_51 : f32 to vector<4x1xf32>
    %77 = arith.maximumf %75, %76 : vector<4x1xf32>
    %78 = math.rsqrt %77 : vector<4x1xf32>
    %79 = vector.broadcast %78 : vector<4x1xf32> to vector<4x32xf32>
    %80 = arith.mulf %72, %79 : vector<4x32xf32>
    %cst_52 = arith.constant dense<0.000000e+00> : vector<2x4xf32>
    %81 = tpu.matmul %71, %80, %cst_52 {dimension_numbers = #tpu.dot_dimension_numbers<[1], [1], [0], [0], [0, 0, 1, 0], [], []>} : vector<2x32xf32>, vector<4x32xf32>, vector<2x4xf32> -> vector<2x4xf32>
    %cst_53 = arith.constant 1.000000e+02 : f32
    %82 = vector.broadcast %cst_53 : f32 to vector<2x4xf32>
    %83 = arith.mulf %81, %82 : vector<2x4xf32>
    %c0_54 = arith.constant 0 : index
    %c0_55 = arith.constant 0 : index
    %84 = vector.load %arg18[%c0_54, %c0_55] : memref<2x4xf32, #tpu.memory_space<vmem>>, vector<2x4xf32>
    tpu.vector_store %arg18[%c0_54, %c0_55], %83 {strides = array<i32>} : memref<2x4xf32, #tpu.memory_space<vmem>>, vector<2x4xf32>,
    return
  }
}

</mosaic_0001>

<llo_original>
// kernel: combiner_forward.3
$region0: #{combiner_forward.3}
  #allocation0 [shape = 'u32[]', space=smem, size = 0x4, offset = 0x4, fixed_abs, tag = 'smem constant byte address 0x4 - core index']
  #allocation1 [shape = 'u32[72,128]{1,0:T(1,128)}', space=vmem, size = 0x9000, scoped, tag = 'internal scratch']
  %s0 = inlined_call_operand.vmem [shape: f32[64,32], index: 0, kind: input, shape index: {}]
  %s1 = inlined_call_operand.vmem [shape: f32[32,32], index: 1, kind: input, shape index: {}]
  %s2 = inlined_call_operand.vmem [shape: f32[1,32], index: 2, kind: input, shape index: {}]
  %s3 = inlined_call_operand.vmem [shape: f32[64,32], index: 3, kind: output, shape index: {}]
  %s4 = sld [smem:[#allocation0]]
  $region22: #{combiner_forward.3} parent=0
    _
  %s6 = ssub.s32 1, %s4
  %s7 = scalar_select 0, %s6, %s4
  // Predicated region
  $region2: #{combiner_forward.3} parent=0 // pred_check
    _
  $region3: #{combiner_forward.3} parent=0 // pred_check_branch
    %9 = sbr.rel (0) target = $region5
  $region4: #{combiner_forward.3} parent=0 // pred_region
    _
  $region5: #{combiner_forward.3} parent=0 // pred_fallthru
    _
  // Predicated region
  $region6: #{combiner_forward.3} parent=0 // pred_check
    _
  $region7: #{combiner_forward.3} parent=0 // pred_check_branch
    %11 = sbr.rel (0) target = $region9
  $region8: #{combiner_forward.3} parent=0 // pred_region
    _
  $region9: #{combiner_forward.3} parent=0 // pred_fallthru
    _
  // Predicated region
  $region10: #{combiner_forward.3} parent=0 // pred_check
    _
  $region11: #{combiner_forward.3} parent=0 // pred_check_branch
    %13 = sbr.rel (0) target = $region13
  $region12: #{combiner_forward.3} parent=0 // pred_region
    _
  $region13: #{combiner_forward.3} parent=0 // pred_fallthru
    _
  %v14 = vld [vmem:[%s0] sm:$0xff]
  %v15 = vld [vmem:[%s0 + $0x8] sm:$0xff]
  %v16 = vld [vmem:[%s0 + $0x10] sm:$0xff]
  %v17 = vld [vmem:[%s0 + $0x18] sm:$0xff]
  %v18 = vld [vmem:[%s0 + $0x20] sm:$0xff]
  %v19 = vld [vmem:[%s0 + $0x28] sm:$0xff]
  %v20 = vld [vmem:[%s0 + $0x30] sm:$0xff]
  %v21 = vld [vmem:[%s0 + $0x38] sm:$0xff]
  %v22 = vld [vmem:[%s1] sm:$0xff]
  %v23 = vld [vmem:[%s1 + $0x8] sm:$0xff]
  %v24 = vld [vmem:[%s1 + $0x10] sm:$0xff]
  %v25 = vld [vmem:[%s1 + $0x18] sm:$0xff]
  %v26 = vld [vmem:[%s2] sm:$0x1]
  %v28 = vperm.slane %v26, 0
  %vm30 = vcmask 261120
  %v32 = vsel %vm30, %v14, 0
  %v35 = vsel %vm30, %v15, 0
  %v38 = vsel %vm30, %v16, 0
  %v41 = vsel %vm30, %v17, 0
  %v44 = vsel %vm30, %v18, 0
  %v47 = vsel %vm30, %v19, 0
  %v50 = vsel %vm30, %v20, 0
  %v53 = vsel %vm30, %v21, 0
  %55 = vmatpush.msra.mxu0 0.0
  %56 = vmatpush.msra.mxu0 0.0
  %57 = vmatpush.msra.mxu0 0.0
  %58 = vmatpush.msra.mxu0 0.0
  %59 = vmatpush.msra.mxu0 0.0
  %60 = vmatpush.msra.mxu0 0.0
  %61 = vmatpush.msra.mxu0 0.0
  %62 = vmatpush.msra.mxu0 0.0
  %63 = vmatpush.msra.mxu0 0.0
  %64 = vmatpush.msra.mxu0 0.0
  %65 = vmatpush.msra.mxu0 0.0
  %66 = vmatpush.msra.mxu0 0.0
  %67 = vmatpush.msra.mxu0 %v25
  %68 = vmatpush.msra.mxu0 %v24
  %69 = vmatpush.msra.mxu0 %v23
  %70 = vmatpush.msra.mxu0 %v22
  %71 = vmatmul.f32.gmra.mxu0 %v32
  %v72 = vpop.f32.mrf.mxu0
  %v73 = vadd.f32 %v28, %v72
  %74 = vmatmul.f32.gmra.mxu0 %v35
  %v75 = vpop.f32.mrf.mxu0
  %v76 = vadd.f32 %v28, %v75
  %77 = vmatmul.f32.gmra.mxu0 %v38
  %v78 = vpop.f32.mrf.mxu0
  %v79 = vadd.f32 %v28, %v78
  %80 = vmatmul.f32.gmra.mxu0 %v41
  %v81 = vpop.f32.mrf.mxu0
  %v82 = vadd.f32 %v28, %v81
  %83 = vmatmul.f32.gmra.mxu0 %v44
  %v84 = vpop.f32.mrf.mxu0
  %v85 = vadd.f32 %v28, %v84
  %86 = vmatmul.f32.gmra.mxu0 %v47
  %v87 = vpop.f32.mrf.mxu0
  %v88 = vadd.f32 %v28, %v87
  %89 = vmatmul.f32.gmra.mxu0 %v50
  %v90 = vpop.f32.mrf.mxu0
  %v91 = vadd.f32 %v28, %v90
  %92 = vmatmul.f32.gmra.mxu0 %v53
  %v93 = vpop.f32.mrf.mxu0
  %v94 = vadd.f32 %v28, %v93
  %95 = vdwg.mxu0
  %v96 = vmax.f32 %v73, 0.0
  %v97 = vmax.f32 %v76, 0.0
  %v98 = vmax.f32 %v79, 0.0
  %v99 = vmax.f32 %v82, 0.0
  %v100 = vmax.f32 %v85, 0.0
  %v101 = vmax.f32 %v88, 0.0
  %v102 = vmax.f32 %v91, 0.0
  %v103 = vmax.f32 %v94, 0.0
  %104 = vst.msk [vmem:[%s3] sm:$0xff] %vm30, %v96
  %105 = vst.msk [vmem:[%s3 + $0x8] sm:$0xff] %vm30, %v97
  %106 = vst.msk [vmem:[%s3 + $0x10] sm:$0xff] %vm30, %v98
  %107 = vst.msk [vmem:[%s3 + $0x18] sm:$0xff] %vm30, %v99
  %108 = vst.msk [vmem:[%s3 + $0x20] sm:$0xff] %vm30, %v100
  %109 = vst.msk [vmem:[%s3 + $0x28] sm:$0xff] %vm30, %v101
  %110 = vst.msk [vmem:[%s3 + $0x30] sm:$0xff] %vm30, %v102
  %111 = vst.msk [vmem:[%s3 + $0x38] sm:$0xff] %vm30, %v103
  // Predicated region
  $region14: #{combiner_forward.3} parent=0 // pred_check
    _
  $region15: #{combiner_forward.3} parent=0 // pred_check_branch
    %113 = sbr.rel (0) target = $region17
  $region16: #{combiner_forward.3} parent=0 // pred_region
    _
  $region17: #{combiner_forward.3} parent=0 // pred_fallthru
    _
  // Predicated region
  $region18: #{combiner_forward.3} parent=0 // pred_check
    _
  $region19: #{combiner_forward.3} parent=0 // pred_check_branch
    %115 = sbr.rel (0) target = $region21
  $region20: #{combiner_forward.3} parent=0 // pred_region
    _
  $region21: #{combiner_forward.3} parent=0 // pred_fallthru
    _

// kernel: combiner_forward.5
$region0: #{combiner_forward.5}
  #allocation0 [shape = 'u32[]', space=smem, size = 0x4, offset = 0x4, fixed_abs, tag = 'smem constant byte address 0x4 - core index']
  #allocation1 [shape = 'u32[72,128]{1,0:T(1,128)}', space=vmem, size = 0x9000, scoped, tag = 'internal scratch']
  #allocation2 [shape = 'f32[1,1]{1,0:T(1,128)S(1)}', space=vmem, size = 0x200, scoped, tag = 'scoped memory for combiner_forward.5']
  %s0 = inlined_call_operand.vmem [shape: f32[2,32], index: 0, kind: input, shape index: {}]
  %s1 = inlined_call_operand.vmem [shape: f32[2,32], index: 1, kind: input, shape index: {}]
  %s2 = inlined_call_operand.vmem [shape: f32[2,32], index: 2, kind: input, shape index: {}]
  %s3 = inlined_call_operand.vmem [shape: f32[4,32], index: 3, kind: input, shape index: {}]
  %s4 = inlined_call_operand.vmem [shape: f32[32,16], index: 4, kind: input, shape index: {}]
  %s5 = inlined_call_operand.vmem [shape: f32[1,16], index: 5, kind: input, shape index: {}]
  %s6 = inlined_call_operand.vmem [shape: f32[32,16], index: 6, kind: input, shape index: {}]
  %s7 = inlined_call_operand.vmem [shape: f32[1,16], index: 7, kind: input, shape index: {}]
  %s8 = inlined_call_operand.vmem [shape: f32[16,48], index: 8, kind: input, shape index: {}]
  %s9 = inlined_call_operand.vmem [shape: f32[16,48], index: 9, kind: input, shape index: {}]
  %s10 = inlined_call_operand.vmem [shape: f32[1,48], index: 10, kind: input, shape index: {}]
  %s11 = inlined_call_operand.vmem [shape: f32[16,48], index: 11, kind: input, shape index: {}]
  %s12 = inlined_call_operand.vmem [shape: f32[16,48], index: 12, kind: input, shape index: {}]
  %s13 = inlined_call_operand.vmem [shape: f32[1,48], index: 13, kind: input, shape index: {}]
  %s14 = inlined_call_operand.vmem [shape: f32[1,48], index: 14, kind: input, shape index: {}]
  %s15 = inlined_call_operand.<no memory space> [shape: f32[1,1], index: 15, kind: input, shape index: {}]
  %s16 = inlined_call_operand.vmem [shape: f32[48,32], index: 16, kind: input, shape index: {}]
  %s17 = inlined_call_operand.vmem [shape: f32[1,32], index: 17, kind: input, shape index: {}]
  %s18 = inlined_call_operand.hbm [shape: f32[2,4], index: 18, kind: output, shape index: {}]
  %s19 = sld [smem:[#allocation0]]
  $region82: #{combiner_forward.5} parent=0
    _
  %s21 = ssub.s32 1, %s19
  %s22 = scalar_select 0, %s21, %s19
  %v23 = vstv %s15
  %24 = vst [vmem:[#allocation2] sm:$0x1] %v23
  $region1: #{combiner_forward.5} parent=0
    #allocation3 [shape = 'u8[1024]{0}', space=vmem, size = 0x400, scoped, tag = 'output window, operand 0, single buffered']
    #allocation4 [shape = 's32[1]{0}', space=sflag, size = 0x4, scoped, tag = 'scoped memory for combiner_forward.5']
    %25 = vsyncpa [#allocation4], 0
    // Predicated region
    $region2: #{combiner_forward.5} parent=1 // pred_check
      _
    $region3: #{combiner_forward.5} parent=1 // pred_check_branch
      %27 = sbr.rel (0) target = $region5
    $region4: #{combiner_forward.5} parent=1 // pred_region
      _
    $region5: #{combiner_forward.5} parent=1 // pred_fallthru
      _
    // Predicated region
    $region6: #{combiner_forward.5} parent=1 // pred_check
      _
    $region7: #{combiner_forward.5} parent=1 // pred_check_branch
      %29 = sbr.rel (0) target = $region9
    $region8: #{combiner_forward.5} parent=1 // pred_region
      _
    $region9: #{combiner_forward.5} parent=1 // pred_fallthru
      _
    // Predicated region
    $region10: #{combiner_forward.5} parent=1 // pred_check
      _
    $region11: #{combiner_forward.5} parent=1 // pred_check_branch
      %31 = sbr.rel (0) target = $region13
    $region12: #{combiner_forward.5} parent=1 // pred_region
      _
    $region13: #{combiner_forward.5} parent=1 // pred_fallthru
      _
    // Predicated region
    $region14: #{combiner_forward.5} parent=1 // pred_check
      _
    $region15: #{combiner_forward.5} parent=1 // pred_check_branch
      %33 = sbr.rel (0) target = $region17
    $region16: #{combiner_forward.5} parent=1 // pred_region
      _
    $region17: #{combiner_forward.5} parent=1 // pred_fallthru
      _
    // Predicated region
    $region18: #{combiner_forward.5} parent=1 // pred_check
      _
    $region19: #{combiner_forward.5} parent=1 // pred_check_branch
      %35 = sbr.rel (0) target = $region21
    $region20: #{combiner_forward.5} parent=1 // pred_region
      _
    $region21: #{combiner_forward.5} parent=1 // pred_fallthru
      _
    // Predicated region
    $region22: #{combiner_forward.5} parent=1 // pred_check
      _
    $region23: #{combiner_forward.5} parent=1 // pred_check_branch
      %37 = sbr.rel (0) target = $region25
    $region24: #{combiner_forward.5} parent=1 // pred_region
      _
    $region25: #{combiner_forward.5} parent=1 // pred_fallthru
      _
    // Predicated region
    $region26: #{combiner_forward.5} parent=1 // pred_check
      _
    $region27: #{combiner_forward.5} parent=1 // pred_check_branch
      %39 = sbr.rel (0) target = $region29
    $region28: #{combiner_forward.5} parent=1 // pred_region
      _
    $region29: #{combiner_forward.5} parent=1 // pred_fallthru
      _
    // Predicated region
    $region30: #{combiner_forward.5} parent=1 // pred_check
      _
    $region31: #{combiner_forward.5} parent=1 // pred_check_branch
      %41 = sbr.rel (0) target = $region33
    $region32: #{combiner_forward.5} parent=1 // pred_region
      _
    $region33: #{combiner_forward.5} parent=1 // pred_fallthru
      _
    // Predicated region
    $region34: #{combiner_forward.5} parent=1 // pred_check
      _
    $region35: #{combiner_forward.5} parent=1 // pred_check_branch
      %43 = sbr.rel (0) target = $region37
    $region36: #{combiner_forward.5} parent=1 // pred_region
      _
    $region37: #{combiner_forward.5} parent=1 // pred_fallthru
      _
    // Predicated region
    $region38: #{combiner_forward.5} parent=1 // pred_check
      _
    $region39: #{combiner_forward.5} parent=1 // pred_check_branch
      %45 = sbr.rel (0) target = $region41
    $region40: #{combiner_forward.5} parent=1 // pred_region
      _
    $region41: #{combiner_forward.5} parent=1 // pred_fallthru
      _
    // Predicated region
    $region42: #{combiner_forward.5} parent=1 // pred_check
      _
    $region43: #{combiner_forward.5} parent=1 // pred_check_branch
      %47 = sbr.rel (0) target = $region45
    $region44: #{combiner_forward.5} parent=1 // pred_region
      _
    $region45: #{combiner_forward.5} parent=1 // pred_fallthru
      _
    // Predicated region
    $region46: #{combiner_forward.5} parent=1 // pred_check
      _
    $region47: #{combiner_forward.5} parent=1 // pred_check_branch
      %49 = sbr.rel (0) target = $region49
    $region48: #{combiner_forward.5} parent=1 // pred_region
      _
    $region49: #{combiner_forward.5} parent=1 // pred_fallthru
      _
    // Predicated region
    $region50: #{combiner_forward.5} parent=1 // pred_check
      _
    $region51: #{combiner_forward.5} parent=1 // pred_check_branch
      %51 = sbr.rel (0) target = $region53
    $region52: #{combiner_forward.5} parent=1 // pred_region
      _
    $region53: #{combiner_forward.5} parent=1 // pred_fallthru
      _
    // Predicated region
    $region54: #{combiner_forward.5} parent=1 // pred_check
      _
    $region55: #{combiner_forward.5} parent=1 // pred_check_branch
      %53 = sbr.rel (0) target = $region57
    $region56: #{combiner_forward.5} parent=1 // pred_region
      _
    $region57: #{combiner_forward.5} parent=1 // pred_fallthru
      _
    // Predicated region
    $region58: #{combiner_forward.5} parent=1 // pred_check
      _
    $region59: #{combiner_forward.5} parent=1 // pred_check_branch
      %55 = sbr.rel (0) target = $region61
    $region60: #{combiner_forward.5} parent=1 // pred_region
      _
    $region61: #{combiner_forward.5} parent=1 // pred_fallthru
      _
    // Predicated region
    $region62: #{combiner_forward.5} parent=1 // pred_check
      _
    $region63: #{combiner_forward.5} parent=1 // pred_check_branch
      %57 = sbr.rel (0) target = $region65
    $region64: #{combiner_forward.5} parent=1 // pred_region
      _
    $region65: #{combiner_forward.5} parent=1 // pred_fallthru
      _
    // Predicated region
    $region66: #{combiner_forward.5} parent=1 // pred_check
      _
    $region67: #{combiner_forward.5} parent=1 // pred_check_branch
      %59 = sbr.rel (0) target = $region69
    $region68: #{combiner_forward.5} parent=1 // pred_region
      _
    $region69: #{combiner_forward.5} parent=1 // pred_fallthru
      _
    // Predicated region
    $region70: #{combiner_forward.5} parent=1 // pred_check
      _
    $region71: #{combiner_forward.5} parent=1 // pred_check_branch
      %61 = sbr.rel (0) target = $region73
    $region72: #{combiner_forward.5} parent=1 // pred_region
      _
    $region73: #{combiner_forward.5} parent=1 // pred_fallthru
      _
    %v62 = vld [vmem:[%s0] sm:$0x3]
    %v63 = vld [vmem:[%s1] sm:$0x3]
    %v64 = vld [vmem:[%s2] sm:$0x3]
    %v65 = vld [vmem:[%s4] sm:$0xff]
    %v66 = vld [vmem:[%s4 + $0x8] sm:$0xff]
    %v67 = vld [vmem:[%s4 + $0x10] sm:$0xff]
    %v68 = vld [vmem:[%s4 + $0x18] sm:$0xff]
    %v69 = vld [vmem:[%s5] sm:$0x1]
    %v71 = vperm.slane %v69, 0
    %vm73 = vcmask 261120
    %v75 = vsel %vm73, %v62, 0
    %77 = vmatpush.msra.mxu0 0.0
    %78 = vmatpush.msra.mxu0 0.0
    %79 = vmatpush.msra.mxu0 0.0
    %80 = vmatpush.msra.mxu0 0.0
    %81 = vmatpush.msra.mxu0 0.0
    %82 = vmatpush.msra.mxu0 0.0
    %83 = vmatpush.msra.mxu0 0.0
    %84 = vmatpush.msra.mxu0 0.0
    %85 = vmatpush.msra.mxu0 0.0
    %86 = vmatpush.msra.mxu0 0.0
    %87 = vmatpush.msra.mxu0 0.0
    %88 = vmatpush.msra.mxu0 0.0
    %89 = vmatpush.msra.mxu0 %v68
    %90 = vmatpush.msra.mxu0 %v67
    %91 = vmatpush.msra.mxu0 %v66
    %92 = vmatpush.msra.mxu0 %v65
    %93 = vmatmul.f32.gmra.mxu0 %v75
    %v94 = vpop.f32.mrf.mxu0
    %v95 = vadd.f32 %v71, %v94
    %96 = vdwg.mxu0
    %v97 = vmax.f32 %v95, 0.0
    %v98 = vld [vmem:[%s6] sm:$0xff]
    %v99 = vld [vmem:[%s6 + $0x8] sm:$0xff]
    %v100 = vld [vmem:[%s6 + $0x10] sm:$0xff]
    %v101 = vld [vmem:[%s6 + $0x18] sm:$0xff]
    %v102 = vld [vmem:[%s7] sm:$0x1]
    %v104 = vperm.slane %v102, 0
    %v107 = vsel %vm73, %v63, 0
    %109 = vmatpush.msra.mxu0 0.0
    %110 = vmatpush.msra.mxu0 0.0
    %111 = vmatpush.msra.mxu0 0.0
    %112 = vmatpush.msra.mxu0 0.0
    %113 = vmatpush.msra.mxu0 0.0
    %114 = vmatpush.msra.mxu0 0.0
    %115 = vmatpush.msra.mxu0 0.0
    %116 = vmatpush.msra.mxu0 0.0
    %117 = vmatpush.msra.mxu0 0.0
    %118 = vmatpush.msra.mxu0 0.0
    %119 = vmatpush.msra.mxu0 0.0
    %120 = vmatpush.msra.mxu0 0.0
    %121 = vmatpush.msra.mxu0 %v101
    %122 = vmatpush.msra.mxu0 %v100
    %123 = vmatpush.msra.mxu0 %v99
    %124 = vmatpush.msra.mxu0 %v98
    %125 = vmatmul.f32.gmra.mxu0 %v107
    %v126 = vpop.f32.mrf.mxu0
    %v127 = vadd.f32 %v104, %v126
    %128 = vdwg.mxu0
    %v129 = vmax.f32 %v127, 0.0
    %v130 = vld [vmem:[%s8] sm:$0xff]
    %v131 = vld [vmem:[%s8 + $0x8] sm:$0xff]
    %v132 = vld [vmem:[%s9] sm:$0xff]
    %v133 = vld [vmem:[%s9 + $0x8] sm:$0xff]
    %vm134 = vcmask 130048
    %v136 = vsel %vm134, %v97, 0
    %138 = vmatpush.msra.mxu0 0.0
    %139 = vmatpush.msra.mxu0 0.0
    %140 = vmatpush.msra.mxu0 0.0
    %141 = vmatpush.msra.mxu0 0.0
    %142 = vmatpush.msra.mxu0 0.0
    %143 = vmatpush.msra.mxu0 0.0
    %144 = vmatpush.msra.mxu0 0.0
    %145 = vmatpush.msra.mxu0 0.0
    %146 = vmatpush.msra.mxu0 0.0
    %147 = vmatpush.msra.mxu0 0.0
    %148 = vmatpush.msra.mxu0 0.0
    %149 = vmatpush.msra.mxu0 0.0
    %150 = vmatpush.msra.mxu0 0.0
    %151 = vmatpush.msra.mxu0 0.0
    %152 = vmatpush.msra.mxu0 %v133
    %153 = vmatpush.msra.mxu0 %v132
    %154 = vmatmul.f32.gmra.mxu0 %v136
    %v155 = vpop.f32.mrf.mxu0
    %v156 = vadd.f32 0.0, %v155
    %157 = vdwg.mxu0
    %v159 = vsel %vm134, %v129, 0
    %161 = vmatpush.msra.mxu0 0.0
    %162 = vmatpush.msra.mxu0 0.0
    %163 = vmatpush.msra.mxu0 0.0
    %164 = vmatpush.msra.mxu0 0.0
    %165 = vmatpush.msra.mxu0 0.0
    %166 = vmatpush.msra.mxu0 0.0
    %167 = vmatpush.msra.mxu0 0.0
    %168 = vmatpush.msra.mxu0 0.0
    %169 = vmatpush.msra.mxu0 0.0
    %170 = vmatpush.msra.mxu0 0.0
    %171 = vmatpush.msra.mxu0 0.0
    %172 = vmatpush.msra.mxu0 0.0
    %173 = vmatpush.msra.mxu0 0.0
    %174 = vmatpush.msra.mxu0 0.0
    %175 = vmatpush.msra.mxu0 %v131
    %176 = vmatpush.msra.mxu0 %v130
    %177 = vmatmul.f32.gmra.mxu0 %v159
    %v178 = vpop.f32.mrf.mxu0
    %v179 = vadd.f32 %v156, %v178
    %180 = vdwg.mxu0
    %v181 = vld [vmem:[%s10] sm:$0x1]
    %v183 = vperm.slane %v181, 0
    %v185 = vadd.f32 %v179, %v183
    %v186 = vmax.f32 %v185, 0.0
    %v187 = vld [vmem:[%s11] sm:$0xff]
    %v188 = vld [vmem:[%s11 + $0x8] sm:$0xff]
    %v189 = vld [vmem:[%s12] sm:$0xff]
    %v190 = vld [vmem:[%s12 + $0x8] sm:$0xff]
    %191 = vmatpush.msra.mxu0 0.0
    %192 = vmatpush.msra.mxu0 0.0
    %193 = vmatpush.msra.mxu0 0.0
    %194 = vmatpush.msra.mxu0 0.0
    %195 = vmatpush.msra.mxu0 0.0
    %196 = vmatpush.msra.mxu0 0.0
    %197 = vmatpush.msra.mxu0 0.0
    %198 = vmatpush.msra.mxu0 0.0
    %199 = vmatpush.msra.mxu0 0.0
    %200 = vmatpush.msra.mxu0 0.0
    %201 = vmatpush.msra.mxu0 0.0
    %202 = vmatpush.msra.mxu0 0.0
    %203 = vmatpush.msra.mxu0 0.0
    %204 = vmatpush.msra.mxu0 0.0
    %205 = vmatpush.msra.mxu0 %v190
    %206 = vmatpush.msra.mxu0 %v189
    %207 = vmatmul.f32.gmra.mxu0 %v136
    %v208 = vpop.f32.mrf.mxu0
    %v209 = vadd.f32 0.0, %v208
    %210 = vdwg.mxu0
    %211 = vmatpush.msra.mxu0 0.0
    %212 = vmatpush.msra.mxu0 0.0
    %213 = vmatpush.msra.mxu0 0.0
    %214 = vmatpush.msra.mxu0 0.0
    %215 = vmatpush.msra.mxu0 0.0
    %216 = vmatpush.msra.mxu0 0.0
    %217 = vmatpush.msra.mxu0 0.0
    %218 = vmatpush.msra.mxu0 0.0
    %219 = vmatpush.msra.mxu0 0.0
    %220 = vmatpush.msra.mxu0 0.0
    %221 = vmatpush.msra.mxu0 0.0
    %222 = vmatpush.msra.mxu0 0.0
    %223 = vmatpush.msra.mxu0 0.0
    %224 = vmatpush.msra.mxu0 0.0
    %225 = vmatpush.msra.mxu0 %v188
    %226 = vmatpush.msra.mxu0 %v187
    %227 = vmatmul.f32.gmra.mxu0 %v159
    %v228 = vpop.f32.mrf.mxu0
    %v229 = vadd.f32 %v209, %v228
    %230 = vdwg.mxu0
    %v231 = vld [vmem:[%s13] sm:$0x1]
    %v233 = vperm.slane %v231, 0
    %v235 = vadd.f32 %v229, %v233
    %v236 = vmax.f32 %v235, 0.0
    %v237 = vld [vmem:[%s14] sm:$0x1]
    %v239 = vperm.slane %v237, 0
    %v241 = vmul.f32 %v236, %v239
    %vm242 = vcmask 386048
    %v243 = vsel %vm242, %v241, 0.0
    %244 = vadd.xlane.f32.xlu0 %v243
    %v245 = vpop.xlane.xlu0 %244
    %v246 = vld [vmem:[#allocation2] sm:$0x1]
    %v248 = vperm.slane %v246, 0
    %v250 = vadd.f32 %v245, %v248
    %v251 = vxor.u32 %v250, 2147483648
    %v252 = vmul.f32 %v251, 1.442695
    %v253 = vpow.pop %v252
    %v254 = vadd.f32 %v253, 1.0
    %v255 = vrcp.pop %v254
    %v256 = vmul.f32 %v254, %v255
    %v257 = vsub.f32 1.0, %v256
    %v258 = vmul.f32 %v255, %v257
    %v259 = vadd.f32 %v255, %v258
    %vm260 = vweird.f32 %v254
    %vm261 = vweird.f32 %v255
    %vm262 = vmor %vm260, %vm261
    %v263 = vsel %vm262, %v255, %v259
    %v264 = vand.u32 2147483647, %v254
    %vm265 = vcmp.eq.f32.partialorder %v264, 8.507059e+37
    %v266 = vand.u32 %v254, 2147483648
    %v267 = vor.u32 1.1754944e-38, %v266
    %v268 = vsel %vm265, %v267, %v263
    %v269 = vmul.f32 1.0, %v268
    %v270 = vld [vmem:[%s16] sm:$0xff]
    %v271 = vld [vmem:[%s16 + $0x8] sm:$0xff]
    %v272 = vld [vmem:[%s16 + $0x10] sm:$0xff]
    %v273 = vld [vmem:[%s16 + $0x18] sm:$0xff]
    %v274 = vld [vmem:[%s16 + $0x20] sm:$0xff]
    %v275 = vld [vmem:[%s16 + $0x28] sm:$0xff]
    %v276 = vld [vmem:[%s17] sm:$0x1]
    %v278 = vperm.slane %v276, 0
    %vm280 = vcmask 392192
    %v282 = vsel %vm280, %v186, 0
    %284 = vmatpush.msra.mxu0 0.0
    %285 = vmatpush.msra.mxu0 0.0
    %286 = vmatpush.msra.mxu0 0.0
    %287 = vmatpush.msra.mxu0 0.0
    %288 = vmatpush.msra.mxu0 0.0
    %289 = vmatpush.msra.mxu0 0.0
    %290 = vmatpush.msra.mxu0 0.0
    %291 = vmatpush.msra.mxu0 0.0
    %292 = vmatpush.msra.mxu0 0.0
    %293 = vmatpush.msra.mxu0 0.0
    %294 = vmatpush.msra.mxu0 %v275
    %295 = vmatpush.msra.mxu0 %v274
    %296 = vmatpush.msra.mxu0 %v273
    %297 = vmatpush.msra.mxu0 %v272
    %298 = vmatpush.msra.mxu0 %v271
    %299 = vmatpush.msra.mxu0 %v270
    %300 = vmatmul.f32.gmra.mxu0 %v282
    %v301 = vpop.f32.mrf.mxu0
    %v302 = vadd.f32 %v278, %v301
    %303 = vdwg.mxu0
    %305 = vset.pattern.permute.xlu0 0
    %306 = vperm.xlu0 %305, %v269
    %v307 = vpop.permute.xlu0 %306
    %v309 = vmul.f32 %v307, %v62
    %v310 = vadd.f32 %v302, %v309
    %v311 = vsub.f32 1.0, %v269
    %313 = vset.pattern.permute.xlu0 0
    %314 = vperm.xlu0 %313, %v311
    %v315 = vpop.permute.xlu0 %314
    %v317 = vmul.f32 %v315, %v63
    %v318 = vadd.f32 %v310, %v317
    %v319 = vadd.f32 %v318, %v64
    %v320 = vmul.f32 %v319, %v319
    %vm321 = vcmask 254976
    %v322 = vsel %vm321, %v320, 0.0
    %323 = vadd.xlane.f32.xlu0 %v322
    %v324 = vpop.xlane.xlu0 %323
    %v325 = vmax.f32 %v324, 1e-24
    %v326 = vrsqrt.pop %v325
    %v327 = vmul.f32 %v326, %v325
    %v328 = vmul.f32 %v327, %v326
    %v329 = vmul.f32 0.5, %v328
    %v330 = vsub.f32 1.5, %v329
    %v331 = vmul.f32 %v326, %v330
    %vm332 = vweird.f32 %v325
    %vm333 = vweird.f32 %v326
    %vm334 = vmor %vm332, %vm333
    %v335 = vsel %vm334, %v326, %v331
    %v336 = vmul.f32 %v319, %v335
    %v337 = vld [vmem:[%s3] sm:$0xf]
    %v338 = vmul.f32 %v337, %v337
    %vm339 = vcmask 257024
    %v340 = vsel %vm339, %v338, 0.0
    %341 = vadd.xlane.f32.xlu0 %v340
    %v342 = vpop.xlane.xlu0 %341
    %v343 = vmax.f32 %v342, 1e-24
    %v344 = vrsqrt.pop %v343
    %v345 = vmul.f32 %v344, %v343
    %v346 = vmul.f32 %v345, %v344
    %v347 = vmul.f32 0.5, %v346
    %v348 = vsub.f32 1.5, %v347
    %v349 = vmul.f32 %v344, %v348
    %vm350 = vweird.f32 %v343
    %vm351 = vweird.f32 %v344
    %vm352 = vmor %vm350, %vm351
    %v353 = vsel %vm352, %v344, %v349
    %v354 = vmul.f32 %v337, %v353
    %v356 = vsel %vm73, %v336, 0
    %v359 = vsel %vm73, %v354, 0
    %361 = vmatpush.xpose.msra.mxu0 0.0
    %362 = vmatpush.xpose.msra.mxu0 0.0
    %363 = vmatpush.xpose.msra.mxu0 0.0
    %364 = vmatpush.xpose.msra.mxu0 0.0
    %365 = vmatpush.xpose.msra.mxu0 0.0
    %366 = vmatpush.xpose.msra.mxu0 0.0
    %367 = vmatpush.xpose.msra.mxu0 0.0
    %368 = vmatpush.xpose.msra.mxu0 0.0
    %369 = vmatpush.xpose.msra.mxu0 0.0
    %370 = vmatpush.xpose.msra.mxu0 0.0
    %371 = vmatpush.xpose.msra.mxu0 0.0
    %372 = vmatpush.xpose.msra.mxu0 0.0
    %373 = vmatpush.xpose.msra.mxu0 0.0
    %374 = vmatpush.xpose.msra.mxu0 0.0
    %375 = vmatpush.xpose.msra.mxu0 0.0
    %376 = vmatpush.xpose.msra.mxu0 %v359
    %377 = vmatmul.f32.gmra.mxu0 %v356
    %v378 = vpop.f32.mrf.mxu0
    %v379 = vadd.f32 0.0, %v378
    %380 = vdwg.mxu0
    %v381 = vmul.f32 %v379, 100.0
    %vm382 = vcmask 25600
    %383 = vst.msk [vmem:[#allocation3] sm:$0x3] %vm382, %v381
    // Predicated region
    $region74: #{combiner_forward.5} parent=1 // pred_check
      _
    $region75: #{combiner_forward.5} parent=1 // pred_check_branch
      %385 = sbr.rel (0) target = $region77
    $region76: #{combiner_forward.5} parent=1 // pred_region
      %387 = vsyncadd [#allocation4], 0
      %s389 = sshll.u32 [#allocation3], 4
      %s390 = int_to_ptr.vmem [resolvable:$true] %s389
      %s391 = sshll.u32 %s18, 4
      %s392 = int_to_ptr.hbm [resolvable:$true] %s391
      %394 = dma.vmem_to_hbm [thread:$0]  %s390, 32, %s392, [#allocation4]
    $region77: #{combiner_forward.5} parent=1 // pred_fallthru
      _
    // Predicated region
    $region78: #{combiner_forward.5} parent=1 // pred_check
      _
    $region79: #{combiner_forward.5} parent=1 // pred_check_branch
      %396 = sbr.rel (0) target = $region81
    $region80: #{combiner_forward.5} parent=1 // pred_region
      %398 = dma.done [#allocation4], 32
    $region81: #{combiner_forward.5} parent=1 // pred_fallthru
      _
    %399 = vsyncpa [#allocation4], 1

// kernel: combiner_forward.4
$region0: #{combiner_forward.4}
  #allocation0 [shape = 'u32[]', space=smem, size = 0x4, offset = 0x4, fixed_abs, tag = 'smem constant byte address 0x4 - core index']
  #allocation1 [shape = 'u32[72,128]{1,0:T(1,128)}', space=vmem, size = 0x9000, scoped, tag = 'internal scratch']
  %s0 = inlined_call_operand.vmem [shape: f32[2,32], index: 0, kind: input, shape index: {}]
  %s1 = inlined_call_operand.vmem [shape: f32[64,32], index: 1, kind: input, shape index: {}]
  %s2 = inlined_call_operand.vmem [shape: f32[64,2], index: 2, kind: input, shape index: {}]
  %s3 = inlined_call_operand.vmem [shape: f32[2,64], index: 3, kind: input, shape index: {}]
  %s4 = inlined_call_operand.vmem [shape: f32[32,8], index: 4, kind: input, shape index: {}]
  %s5 = inlined_call_operand.vmem [shape: f32[8,32], index: 5, kind: input, shape index: {}]
  %s6 = inlined_call_operand.vmem [shape: f32[32,32], index: 6, kind: input, shape index: {}]
  %s7 = inlined_call_operand.vmem [shape: f32[1,32], index: 7, kind: input, shape index: {}]
  %s8 = inlined_call_operand.vmem [shape: f32[1,32], index: 8, kind: input, shape index: {}]
  %s9 = inlined_call_operand.vmem [shape: f32[1,32], index: 9, kind: input, shape index: {}]
  %s10 = inlined_call_operand.vmem [shape: f32[32,32], index: 10, kind: input, shape index: {}]
  %s11 = inlined_call_operand.vmem [shape: f32[1,32], index: 11, kind: input, shape index: {}]
  %s12 = inlined_call_operand.vmem [shape: f32[32,32], index: 12, kind: input, shape index: {}]
  %s13 = inlined_call_operand.vmem [shape: f32[1,32], index: 13, kind: input, shape index: {}]
  %s14 = inlined_call_operand.vmem [shape: f32[32,32], index: 14, kind: input, shape index: {}]
  %s15 = inlined_call_operand.vmem [shape: f32[1,32], index: 15, kind: input, shape index: {}]
  %s16 = inlined_call_operand.vmem [shape: f32[32,32], index: 16, kind: input, shape index: {}]
  %s17 = inlined_call_operand.vmem [shape: f32[1,32], index: 17, kind: input, shape index: {}]
  %s18 = inlined_call_operand.vmem [shape: f32[1,32], index: 18, kind: input, shape index: {}]
  %s19 = inlined_call_operand.vmem [shape: f32[1,32], index: 19, kind: input, shape index: {}]
  %s20 = inlined_call_operand.vmem [shape: f32[32,128], index: 20, kind: input, shape index: {}]
  %s21 = inlined_call_operand.vmem [shape: f32[1,128], index: 21, kind: input, shape index: {}]
  %s22 = inlined_call_operand.vmem [shape: f32[128,32], index: 22, kind: input, shape index: {}]
  %s23 = inlined_call_operand.vmem [shape: f32[1,32], index: 23, kind: input, shape index: {}]
  %s24 = inlined_call_operand.vmem [shape: f32[2,32], index: 24, kind: output, shape index: {}]
  %s25 = sld [smem:[#allocation0]]
  $region106: #{combiner_forward.4} parent=0
    _
  %s27 = ssub.s32 1, %s25
  %s28 = scalar_select 0, %s27, %s25
  // Predicated region
  $region2: #{combiner_forward.4} parent=0 // pred_check
    _
  $region3: #{combiner_forward.4} parent=0 // pred_check_branch
    %30 = sbr.rel (0) target = $region5
  $region4: #{combiner_forward.4} parent=0 // pred_region
    _
  $region5: #{combiner_forward.4} parent=0 // pred_fallthru
    _
  // Predicated region
  $region6: #{combiner_forward.4} parent=0 // pred_check
    _
  $region7: #{combiner_forward.4} parent=0 // pred_check_branch
    %32 = sbr.rel (0) target = $region9
  $region8: #{combiner_forward.4} parent=0 // pred_region
    _
  $region9: #{combiner_forward.4} parent=0 // pred_fallthru
    _
  // Predicated region
  $region10: #{combiner_forward.4} parent=0 // pred_check
    _
  $region11: #{combiner_forward.4} parent=0 // pred_check_branch
    %34 = sbr.rel (0) target = $region13
  $region12: #{combiner_forward.4} parent=0 // pred_region
    _
  $region13: #{combiner_forward.4} parent=0 // pred_fallthru
    _
  // Predicated region
  $region14: #{combiner_forward.4} parent=0 // pred_check
    _
  $region15: #{combiner_forward.4} parent=0 // pred_check_branch
    %36 = sbr.rel (0) target = $region17
  $region16: #{combiner_forward.4} parent=0 // pred_region
    _
  $region17: #{combiner_forward.4} parent=0 // pred_fallthru
    _
  // Predicated region
  $region18: #{combiner_forward.4} parent=0 // pred_check
    _
  $region19: #{combiner_forward.4} parent=0 // pred_check_branch
    %38 = sbr.rel (0) target = $region21
  $region20: #{combiner_forward.4} parent=0 // pred_region
    _
  $region21: #{combiner_forward.4} parent=0 // pred_fallthru
    _
  // Predicated region
  $region22: #{combiner_forward.4} parent=0 // pred_check
    _
  $region23: #{combiner_forward.4} parent=0 // pred_check_branch
    %40 = sbr.rel (0) target = $region25
  $region24: #{combiner_forward.4} parent=0 // pred_region
    _
  $region25: #{combiner_forward.4} parent=0 // pred_fallthru
    _
  // Predicated region
  $region26: #{combiner_forward.4} parent=0 // pred_check
    _
  $region27: #{combiner_forward.4} parent=0 // pred_check_branch
    %42 = sbr.rel (0) target = $region29
  $region28: #{combiner_forward.4} parent=0 // pred_region
    _
  $region29: #{combiner_forward.4} parent=0 // pred_fallthru
    _
  // Predicated region
  $region30: #{combiner_forward.4} parent=0 // pred_check
    _
  $region31: #{combiner_forward.4} parent=0 // pred_check_branch
    %44 = sbr.rel (0) target = $region33
  $region32: #{combiner_forward.4} parent=0 // pred_region
    _
  $region33: #{combiner_forward.4} parent=0 // pred_fallthru
    _
  // Predicated region
  $region34: #{combiner_forward.4} parent=0 // pred_check
    _
  $region35: #{combiner_forward.4} parent=0 // pred_check_branch
    %46 = sbr.rel (0) target = $region37
  $region36: #{combiner_forward.4} parent=0 // pred_region
    _
  $region37: #{combiner_forward.4} parent=0 // pred_fallthru
    _
  // Predicated region
  $region38: #{combiner_forward.4} parent=0 // pred_check
    _
  $region39: #{combiner_forward.4} parent=0 // pred_check_branch
    %48 = sbr.rel (0) target = $region41
  $region40: #{combiner_forward.4} parent=0 // pred_region
    _
  $region41: #{combiner_forward.4} parent=0 // pred_fallthru
    _
  // Predicated region
  $region42: #{combiner_forward.4} parent=0 // pred_check
    _
  $region43: #{combiner_forward.4} parent=0 // pred_check_branch
    %50 = sbr.rel (0) target = $region45
  $region44: #{combiner_forward.4} parent=0 // pred_region
    _
  $region45: #{combiner_forward.4} parent=0 // pred_fallthru
    _
  // Predicated region
  $region46: #{combiner_forward.4} parent=0 // pred_check
    _
  $region47: #{combiner_forward.4} parent=0 // pred_check_branch
    %52 = sbr.rel (0) target = $region49
  $region48: #{combiner_forward.4} parent=0 // pred_region
    _
  $region49: #{combiner_forward.4} parent=0 // pred_fallthru
    _
  // Predicated region
  $region50: #{combiner_forward.4} parent=0 // pred_check
    _
  $region51: #{combiner_forward.4} parent=0 // pred_check_branch
    %54 = sbr.rel (0) target = $region53
  $region52: #{combiner_forward.4} parent=0 // pred_region
    _
  $region53: #{combiner_forward.4} parent=0 // pred_fallthru
    _
  // Predicated region
  $region54: #{combiner_forward.4} parent=0 // pred_check
    _
  $region55: #{combiner_forward.4} parent=0 // pred_check_branch
    %56 = sbr.rel (0) target = $region57
  $region56: #{combiner_forward.4} parent=0 // pred_region
    _
  $region57: #{combiner_forward.4} parent=0 // pred_fallthru
    _
  // Predicated region
  $region58: #{combiner_forward.4} parent=0 // pred_check
    _
  $region59: #{combiner_forward.4} parent=0 // pred_check_branch
    %58 = sbr.rel (0) target = $region61
  $region60: #{combiner_forward.4} parent=0 // pred_region
    _
  $region61: #{combiner_forward.4} parent=0 // pred_fallthru
    _
  // Predicated region
  $region62: #{combiner_forward.4} parent=0 // pred_check
    _
  $region63: #{combiner_forward.4} parent=0 // pred_check_branch
    %60 = sbr.rel (0) target = $region65
  $region64: #{combiner_forward.4} parent=0 // pred_region
    _
  $region65: #{combiner_forward.4} parent=0 // pred_fallthru
    _
  // Predicated region
  $region66: #{combiner_forward.4} parent=0 // pred_check
    _
  $region67: #{combiner_forward.4} parent=0 // pred_check_branch
    %62 = sbr.rel (0) target = $region69
  $region68: #{combiner_forward.4} parent=0 // pred_region
    _
  $region69: #{combiner_forward.4} parent=0 // pred_fallthru
    _
  // Predicated region
  $region70: #{combiner_forward.4} parent=0 // pred_check
    _
  $region71: #{combiner_forward.4} parent=0 // pred_check_branch
    %64 = sbr.rel (0) target = $region73
  $region72: #{combiner_forward.4} parent=0 // pred_region
    _
  $region73: #{combiner_forward.4} parent=0 // pred_fallthru
    _
  // Predicated region
  $region74: #{combiner_forward.4} parent=0 // pred_check
    _
  $region75: #{combiner_forward.4} parent=0 // pred_check_branch
    %66 = sbr.rel (0) target = $region77
  $region76: #{combiner_forward.4} parent=0 // pred_region
    _
  $region77: #{combiner_forward.4} parent=0 // pred_fallthru
    _
  // Predicated region
  $region78: #{combiner_forward.4} parent=0 // pred_check
    _
  $region79: #{combiner_forward.4} parent=0 // pred_check_branch
    %68 = sbr.rel (0) target = $region81
  $region80: #{combiner_forward.4} parent=0 // pred_region
    _
  $region81: #{combiner_forward.4} parent=0 // pred_fallthru
    _
  // Predicated region
  $region82: #{combiner_forward.4} parent=0 // pred_check
    _
  $region83: #{combiner_forward.4} parent=0 // pred_check_branch
    %70 = sbr.rel (0) target = $region85
  $region84: #{combiner_forward.4} parent=0 // pred_region
    _
  $region85: #{combiner_forward.4} parent=0 // pred_fallthru
    _
  // Predicated region
  $region86: #{combiner_forward.4} parent=0 // pred_check
    _
  $region87: #{combiner_forward.4} parent=0 // pred_check_branch
    %72 = sbr.rel (0) target = $region89
  $region88: #{combiner_forward.4} parent=0 // pred_region
    _
  $region89: #{combiner_forward.4} parent=0 // pred_fallthru
    _
  // Predicated region
  $region90: #{combiner_forward.4} parent=0 // pred_check
    _
  $region91: #{combiner_forward.4} parent=0 // pred_check_branch
    %74 = sbr.rel (0) target = $region93
  $region92: #{combiner_forward.4} parent=0 // pred_region
    _
  $region93: #{combiner_forward.4} parent=0 // pred_fallthru
    _
  // Predicated region
  $region94: #{combiner_forward.4} parent=0 // pred_check
    _
  $region95: #{combiner_forward.4} parent=0 // pred_check_branch
    %76 = sbr.rel (0) target = $region97
  $region96: #{combiner_forward.4} parent=0 // pred_region
    _
  $region97: #{combiner_forward.4} parent=0 // pred_fallthru
    _
  %v77 = vld [vmem:[%s0] sm:$0x3]
  %v78 = vld [vmem:[%s1] sm:$0xff]
  %v79 = vld [vmem:[%s1 + $0x8] sm:$0xff]
  %v80 = vld [vmem:[%s1 + $0x10] sm:$0xff]
  %v81 = vld [vmem:[%s1 + $0x18] sm:$0xff]
  %v82 = vld [vmem:[%s1 + $0x20] sm:$0xff]
  %v83 = vld [vmem:[%s1 + $0x28] sm:$0xff]
  %v84 = vld [vmem:[%s1 + $0x30] sm:$0xff]
  %v85 = vld [vmem:[%s1 + $0x38] sm:$0xff]
  %v86 = vld [vmem:[%s2] sm:$0xff]
  %v87 = vld [vmem:[%s2 + $0x8] sm:$0xff]
  %v88 = vld [vmem:[%s2 + $0x10] sm:$0xff]
  %v89 = vld [vmem:[%s2 + $0x18] sm:$0xff]
  %v90 = vld [vmem:[%s2 + $0x20] sm:$0xff]
  %v91 = vld [vmem:[%s2 + $0x28] sm:$0xff]
  %v92 = vld [vmem:[%s2 + $0x30] sm:$0xff]
  %v93 = vld [vmem:[%s2 + $0x38] sm:$0xff]
  %v94 = vld [vmem:[%s3] sm:$0x3]
  %v95 = vld [vmem:[%s4] sm:$0xff]
  %v96 = vld [vmem:[%s4 + $0x8] sm:$0xff]
  %v97 = vld [vmem:[%s4 + $0x10] sm:$0xff]
  %v98 = vld [vmem:[%s4 + $0x18] sm:$0xff]
  %v99 = vld [vmem:[%s5] sm:$0xff]
  %v100 = vld [vmem:[%s6] sm:$0xff]
  %v101 = vld [vmem:[%s6 + $0x8] sm:$0xff]
  %v102 = vld [vmem:[%s6 + $0x10] sm:$0xff]
  %v103 = vld [vmem:[%s6 + $0x18] sm:$0xff]
  %v104 = vld [vmem:[%s7] sm:$0x1]
  %v106 = vperm.slane %v104, 0
  %vm108 = vcmask 261120
  %v110 = vsel %vm108, %v77, 0
  %112 = vmatpush.msra.mxu0 0.0
  %113 = vmatpush.msra.mxu0 0.0
  %114 = vmatpush.msra.mxu0 0.0
  %115 = vmatpush.msra.mxu0 0.0
  %116 = vmatpush.msra.mxu0 0.0
  %117 = vmatpush.msra.mxu0 0.0
  %118 = vmatpush.msra.mxu0 0.0
  %119 = vmatpush.msra.mxu0 0.0
  %120 = vmatpush.msra.mxu0 0.0
  %121 = vmatpush.msra.mxu0 0.0
  %122 = vmatpush.msra.mxu0 0.0
  %123 = vmatpush.msra.mxu0 0.0
  %124 = vmatpush.msra.mxu0 %v103
  %125 = vmatpush.msra.mxu0 %v102
  %126 = vmatpush.msra.mxu0 %v101
  %127 = vmatpush.msra.mxu0 %v100
  %128 = vmatmul.f32.gmra.mxu0 %v110
  %v129 = vpop.f32.mrf.mxu0
  %v130 = vadd.f32 %v106, %v129
  %131 = vdwg.mxu0
  %v132 = vmax.f32 %v130, 0.0
  %v133 = vld [vmem:[%s8] sm:$0x1]
  %v134 = vld [vmem:[%s9] sm:$0x1]
  %vm135 = vcmask 254976
  %v136 = vsel %vm135, %v132, 0.0
  %137 = vadd.xlane.f32.xlu0 %v136
  %v138 = vpop.xlane.xlu0 %137
  %v139 = vrcp.pop 32.0
  %v140 = vmul.f32 32.0, %v139
  %v141 = vsub.f32 1.0, %v140
  %v142 = vmul.f32 %v139, %v141
  %v143 = vadd.f32 %v139, %v142
  %vm144 = vweird.f32 %v139
  %v145 = vsel %vm144, %v139, %v143
  %v146 = vmul.f32 %v138, %v145
  %v147 = vsub.f32 %v132, %v146
  %v148 = vmul.f32 %v147, %v147
  %v149 = vsel %vm135, %v148, 0.0
  %150 = vadd.xlane.f32.xlu0 %v149
  %v151 = vpop.xlane.xlu0 %150
  %v152 = vmul.f32 %v151, %v145
  %v153 = vadd.f32 %v152, 1e-05
  %v154 = vrsqrt.pop %v153
  %v155 = vmul.f32 %v154, %v153
  %v156 = vmul.f32 %v155, %v154
  %v157 = vmul.f32 0.5, %v156
  %v158 = vsub.f32 1.5, %v157
  %v159 = vmul.f32 %v154, %v158
  %vm160 = vweird.f32 %v153
  %vm161 = vweird.f32 %v154
  %vm162 = vmor %vm160, %vm161
  %v163 = vsel %vm162, %v154, %v159
  %v164 = vmul.f32 %v147, %v163
  %v166 = vperm.slane %v133, 0
  %v168 = vmul.f32 %v164, %v166
  %v170 = vperm.slane %v134, 0
  %v172 = vadd.f32 %v168, %v170
  %v173 = vsel %vm108, %v78, 0.0
  %174 = vadd.xlane.f32.xlu0 %v173
  %v175 = vpop.xlane.xlu0 %174
  %v176 = vsel %vm108, %v79, 0.0
  %177 = vadd.xlane.f32.xlu0 %v176
  %v178 = vpop.xlane.xlu0 %177
  %v179 = vsel %vm108, %v80, 0.0
  %180 = vadd.xlane.f32.xlu0 %v179
  %v181 = vpop.xlane.xlu0 %180
  %v182 = vsel %vm108, %v81, 0.0
  %183 = vadd.xlane.f32.xlu0 %v182
  %v184 = vpop.xlane.xlu0 %183
  %v185 = vsel %vm108, %v82, 0.0
  %186 = vadd.xlane.f32.xlu0 %v185
  %v187 = vpop.xlane.xlu0 %186
  %v188 = vsel %vm108, %v83, 0.0
  %189 = vadd.xlane.f32.xlu0 %v188
  %v190 = vpop.xlane.xlu0 %189
  %v191 = vsel %vm108, %v84, 0.0
  %192 = vadd.xlane.f32.xlu0 %v191
  %v193 = vpop.xlane.xlu0 %192
  %v194 = vsel %vm108, %v85, 0.0
  %195 = vadd.xlane.f32.xlu0 %v194
  %v196 = vpop.xlane.xlu0 %195
  %v197 = vmul.f32 %v175, %v145
  %v198 = vmul.f32 %v178, %v145
  %v199 = vmul.f32 %v181, %v145
  %v200 = vmul.f32 %v184, %v145
  %v201 = vmul.f32 %v187, %v145
  %v202 = vmul.f32 %v190, %v145
  %v203 = vmul.f32 %v193, %v145
  %v204 = vmul.f32 %v196, %v145
  %v205 = vsub.f32 %v78, %v197
  %v206 = vsub.f32 %v79, %v198
  %v207 = vsub.f32 %v80, %v199
  %v208 = vsub.f32 %v81, %v200
  %v209 = vsub.f32 %v82, %v201
  %v210 = vsub.f32 %v83, %v202
  %v211 = vsub.f32 %v84, %v203
  %v212 = vsub.f32 %v85, %v204
  %v213 = vmul.f32 %v205, %v205
  %v214 = vmul.f32 %v206, %v206
  %v215 = vmul.f32 %v207, %v207
  %v216 = vmul.f32 %v208, %v208
  %v217 = vmul.f32 %v209, %v209
  %v218 = vmul.f32 %v210, %v210
  %v219 = vmul.f32 %v211, %v211
  %v220 = vmul.f32 %v212, %v212
  %v221 = vsel %vm108, %v213, 0.0
  %222 = vadd.xlane.f32.xlu0 %v221
  %v223 = vpop.xlane.xlu0 %222
  %v224 = vsel %vm108, %v214, 0.0
  %225 = vadd.xlane.f32.xlu0 %v224
  %v226 = vpop.xlane.xlu0 %225
  %v227 = vsel %vm108, %v215, 0.0
  %228 = vadd.xlane.f32.xlu0 %v227
  %v229 = vpop.xlane.xlu0 %228
  %v230 = vsel %vm108, %v216, 0.0
  %231 = vadd.xlane.f32.xlu0 %v230
  %v232 = vpop.xlane.xlu0 %231
  %v233 = vsel %vm108, %v217, 0.0
  %234 = vadd.xlane.f32.xlu0 %v233
  %v235 = vpop.xlane.xlu0 %234
  %v236 = vsel %vm108, %v218, 0.0
  %237 = vadd.xlane.f32.xlu0 %v236
  %v238 = vpop.xlane.xlu0 %237
  %v239 = vsel %vm108, %v219, 0.0
  %240 = vadd.xlane.f32.xlu0 %v239
  %v241 = vpop.xlane.xlu0 %240
  %v242 = vsel %vm108, %v220, 0.0
  %243 = vadd.xlane.f32.xlu0 %v242
  %v244 = vpop.xlane.xlu0 %243
  %v245 = vmul.f32 %v223, %v145
  %v246 = vmul.f32 %v226, %v145
  %v247 = vmul.f32 %v229, %v145
  %v248 = vmul.f32 %v232, %v145
  %v249 = vmul.f32 %v235, %v145
  %v250 = vmul.f32 %v238, %v145
  %v251 = vmul.f32 %v241, %v145
  %v252 = vmul.f32 %v244, %v145
  %v253 = vadd.f32 %v245, 1e-05
  %v254 = vadd.f32 %v246, 1e-05
  %v255 = vadd.f32 %v247, 1e-05
  %v256 = vadd.f32 %v248, 1e-05
  %v257 = vadd.f32 %v249, 1e-05
  %v258 = vadd.f32 %v250, 1e-05
  %v259 = vadd.f32 %v251, 1e-05
  %v260 = vadd.f32 %v252, 1e-05
  %v261 = vrsqrt.pop %v253
  %v262 = vmul.f32 %v261, %v253
  %v263 = vmul.f32 %v262, %v261
  %v264 = vmul.f32 0.5, %v263
  %v265 = vsub.f32 1.5, %v264
  %v266 = vmul.f32 %v261, %v265
  %vm267 = vweird.f32 %v253
  %vm268 = vweird.f32 %v261
  %vm269 = vmor %vm267, %vm268
  %v270 = vsel %vm269, %v261, %v266
  %v271 = vrsqrt.pop %v254
  %v272 = vmul.f32 %v271, %v254
  %v273 = vmul.f32 %v272, %v271
  %v274 = vmul.f32 0.5, %v273
  %v275 = vsub.f32 1.5, %v274
  %v276 = vmul.f32 %v271, %v275
  %vm277 = vweird.f32 %v254
  %vm278 = vweird.f32 %v271
  %vm279 = vmor %vm277, %vm278
  %v280 = vsel %vm279, %v271, %v276
  %v281 = vrsqrt.pop %v255
  %v282 = vmul.f32 %v281, %v255
  %v283 = vmul.f32 %v282, %v281
  %v284 = vmul.f32 0.5, %v283
  %v285 = vsub.f32 1.5, %v284
  %v286 = vmul.f32 %v281, %v285
  %vm287 = vweird.f32 %v255
  %vm288 = vweird.f32 %v281
  %vm289 = vmor %vm287, %vm288
  %v290 = vsel %vm289, %v281, %v286
  %v291 = vrsqrt.pop %v256
  %v292 = vmul.f32 %v291, %v256
  %v293 = vmul.f32 %v292, %v291
  %v294 = vmul.f32 0.5, %v293
  %v295 = vsub.f32 1.5, %v294
  %v296 = vmul.f32 %v291, %v295
  %vm297 = vweird.f32 %v256
  %vm298 = vweird.f32 %v291
  %vm299 = vmor %vm297, %vm298
  %v300 = vsel %vm299, %v291, %v296
  %v301 = vrsqrt.pop %v257
  %v302 = vmul.f32 %v301, %v257
  %v303 = vmul.f32 %v302, %v301
  %v304 = vmul.f32 0.5, %v303
  %v305 = vsub.f32 1.5, %v304
  %v306 = vmul.f32 %v301, %v305
  %vm307 = vweird.f32 %v257
  %vm308 = vweird.f32 %v301
  %vm309 = vmor %vm307, %vm308
  %v310 = vsel %vm309, %v301, %v306
  %v311 = vrsqrt.pop %v258
  %v312 = vmul.f32 %v311, %v258
  %v313 = vmul.f32 %v312, %v311
  %v314 = vmul.f32 0.5, %v313
  %v315 = vsub.f32 1.5, %v314
  %v316 = vmul.f32 %v311, %v315
  %vm317 = vweird.f32 %v258
  %vm318 = vweird.f32 %v311
  %vm319 = vmor %vm317, %vm318
  %v320 = vsel %vm319, %v311, %v316
  %v321 = vrsqrt.pop %v259
  %v322 = vmul.f32 %v321, %v259
  %v323 = vmul.f32 %v322, %v321
  %v324 = vmul.f32 0.5, %v323
  %v325 = vsub.f32 1.5, %v324
  %v326 = vmul.f32 %v321, %v325
  %vm327 = vweird.f32 %v259
  %vm328 = vweird.f32 %v321
  %vm329 = vmor %vm327, %vm328
  %v330 = vsel %vm329, %v321, %v326
  %v331 = vrsqrt.pop %v260
  %v332 = vmul.f32 %v331, %v260
  %v333 = vmul.f32 %v332, %v331
  %v334 = vmul.f32 0.5, %v333
  %v335 = vsub.f32 1.5, %v334
  %v336 = vmul.f32 %v331, %v335
  %vm337 = vweird.f32 %v260
  %vm338 = vweird.f32 %v331
  %vm339 = vmor %vm337, %vm338
  %v340 = vsel %vm339, %v331, %v336
  %v341 = vmul.f32 %v205, %v270
  %v342 = vmul.f32 %v206, %v280
  %v343 = vmul.f32 %v207, %v290
  %v344 = vmul.f32 %v208, %v300
  %v345 = vmul.f32 %v209, %v310
  %v346 = vmul.f32 %v210, %v320
  %v347 = vmul.f32 %v211, %v330
  %v348 = vmul.f32 %v212, %v340
  %v349 = vmul.f32 %v341, %v166
  %v350 = vmul.f32 %v342, %v166
  %v351 = vmul.f32 %v343, %v166
  %v352 = vmul.f32 %v344, %v166
  %v353 = vmul.f32 %v345, %v166
  %v354 = vmul.f32 %v346, %v166
  %v355 = vmul.f32 %v347, %v166
  %v356 = vmul.f32 %v348, %v166
  %v357 = vadd.f32 %v349, %v170
  %v358 = vadd.f32 %v350, %v170
  %v359 = vadd.f32 %v351, %v170
  %v360 = vadd.f32 %v352, %v170
  %v361 = vadd.f32 %v353, %v170
  %v362 = vadd.f32 %v354, %v170
  %v363 = vadd.f32 %v355, %v170
  %v364 = vadd.f32 %v356, %v170
  %v365 = vld [vmem:[%s10] sm:$0xff]
  %v366 = vld [vmem:[%s10 + $0x8] sm:$0xff]
  %v367 = vld [vmem:[%s10 + $0x10] sm:$0xff]
  %v368 = vld [vmem:[%s10 + $0x18] sm:$0xff]
  %v369 = vld [vmem:[%s11] sm:$0x1]
  %v371 = vperm.slane %v369, 0
  %v374 = vsel %vm108, %v172, 0
  %376 = vmatpush.msra.mxu0 0.0
  %377 = vmatpush.msra.mxu0 0.0
  %378 = vmatpush.msra.mxu0 0.0
  %379 = vmatpush.msra.mxu0 0.0
  %380 = vmatpush.msra.mxu0 0.0
  %381 = vmatpush.msra.mxu0 0.0
  %382 = vmatpush.msra.mxu0 0.0
  %383 = vmatpush.msra.mxu0 0.0
  %384 = vmatpush.msra.mxu0 0.0
  %385 = vmatpush.msra.mxu0 0.0
  %386 = vmatpush.msra.mxu0 0.0
  %387 = vmatpush.msra.mxu0 0.0
  %388 = vmatpush.msra.mxu0 %v368
  %389 = vmatpush.msra.mxu0 %v367
  %390 = vmatpush.msra.mxu0 %v366
  %391 = vmatpush.msra.mxu0 %v365
  %392 = vmatmul.f32.gmra.mxu0 %v374
  %v393 = vpop.f32.mrf.mxu0
  %v394 = vadd.f32 %v371, %v393
  %395 = vdwg.mxu0
  %v396 = vmul.f32 %v394, 0.5
  %v397 = vld [vmem:[%s12] sm:$0xff]
  %v398 = vld [vmem:[%s12 + $0x8] sm:$0xff]
  %v399 = vld [vmem:[%s12 + $0x10] sm:$0xff]
  %v400 = vld [vmem:[%s12 + $0x18] sm:$0xff]
  %v401 = vld [vmem:[%s13] sm:$0x1]
  %v403 = vperm.slane %v401, 0
  %v406 = vsel %vm108, %v357, 0
  %v409 = vsel %vm108, %v358, 0
  %v412 = vsel %vm108, %v359, 0
  %v415 = vsel %vm108, %v360, 0
  %v418 = vsel %vm108, %v361, 0
  %v421 = vsel %vm108, %v362, 0
  %v424 = vsel %vm108, %v363, 0
  %v427 = vsel %vm108, %v364, 0
  %429 = vmatpush.msra.mxu0 0.0
  %430 = vmatpush.msra.mxu0 0.0
  %431 = vmatpush.msra.mxu0 0.0
  %432 = vmatpush.msra.mxu0 0.0
  %433 = vmatpush.msra.mxu0 0.0
  %434 = vmatpush.msra.mxu0 0.0
  %435 = vmatpush.msra.mxu0 0.0
  %436 = vmatpush.msra.mxu0 0.0
  %437 = vmatpush.msra.mxu0 0.0
  %438 = vmatpush.msra.mxu0 0.0
  %439 = vmatpush.msra.mxu0 0.0
  %440 = vmatpush.msra.mxu0 0.0
  %441 = vmatpush.msra.mxu0 %v400
  %442 = vmatpush.msra.mxu0 %v399
  %443 = vmatpush.msra.mxu0 %v398
  %444 = vmatpush.msra.mxu0 %v397
  %445 = vmatmul.f32.gmra.mxu0 %v406
  %v446 = vpop.f32.mrf.mxu0
  %v447 = vadd.f32 %v403, %v446
  %448 = vmatmul.f32.gmra.mxu0 %v409
  %v449 = vpop.f32.mrf.mxu0
  %v450 = vadd.f32 %v403, %v449
  %451 = vmatmul.f32.gmra.mxu0 %v412
  %v452 = vpop.f32.mrf.mxu0
  %v453 = vadd.f32 %v403, %v452
  %454 = vmatmul.f32.gmra.mxu0 %v415
  %v455 = vpop.f32.mrf.mxu0
  %v456 = vadd.f32 %v403, %v455
  %457 = vmatmul.f32.gmra.mxu0 %v418
  %v458 = vpop.f32.mrf.mxu0
  %v459 = vadd.f32 %v403, %v458
  %460 = vmatmul.f32.gmra.mxu0 %v421
  %v461 = vpop.f32.mrf.mxu0
  %v462 = vadd.f32 %v403, %v461
  %463 = vmatmul.f32.gmra.mxu0 %v424
  %v464 = vpop.f32.mrf.mxu0
  %v465 = vadd.f32 %v403, %v464
  %466 = vmatmul.f32.gmra.mxu0 %v427
  %v467 = vpop.f32.mrf.mxu0
  %v468 = vadd.f32 %v403, %v467
  %469 = vdwg.mxu0
  %v470 = vld [vmem:[%s14] sm:$0xff]
  %v471 = vld [vmem:[%s14 + $0x8] sm:$0xff]
  %v472 = vld [vmem:[%s14 + $0x10] sm:$0xff]
  %v473 = vld [vmem:[%s14 + $0x18] sm:$0xff]
  %v474 = vld [vmem:[%s15] sm:$0x1]
  %v476 = vperm.slane %v474, 0
  %478 = vmatpush.msra.mxu0 0.0
  %479 = vmatpush.msra.mxu0 0.0
  %480 = vmatpush.msra.mxu0 0.0
  %481 = vmatpush.msra.mxu0 0.0
  %482 = vmatpush.msra.mxu0 0.0
  %483 = vmatpush.msra.mxu0 0.0
  %484 = vmatpush.msra.mxu0 0.0
  %485 = vmatpush.msra.mxu0 0.0
  %486 = vmatpush.msra.mxu0 0.0
  %487 = vmatpush.msra.mxu0 0.0
  %488 = vmatpush.msra.mxu0 0.0
  %489 = vmatpush.msra.mxu0 0.0
  %490 = vmatpush.msra.mxu0 %v473
  %491 = vmatpush.msra.mxu0 %v472
  %492 = vmatpush.msra.mxu0 %v471
  %493 = vmatpush.msra.mxu0 %v470
  %494 = vmatmul.f32.gmra.mxu0 %v406
  %v495 = vpop.f32.mrf.mxu0
  %v496 = vadd.f32 %v476, %v495
  %497 = vmatmul.f32.gmra.mxu0 %v409
  %v498 = vpop.f32.mrf.mxu0
  %v499 = vadd.f32 %v476, %v498
  %500 = vmatmul.f32.gmra.mxu0 %v412
  %v501 = vpop.f32.mrf.mxu0
  %v502 = vadd.f32 %v476, %v501
  %503 = vmatmul.f32.gmra.mxu0 %v415
  %v504 = vpop.f32.mrf.mxu0
  %v505 = vadd.f32 %v476, %v504
  %506 = vmatmul.f32.gmra.mxu0 %v418
  %v507 = vpop.f32.mrf.mxu0
  %v508 = vadd.f32 %v476, %v507
  %509 = vmatmul.f32.gmra.mxu0 %v421
  %v510 = vpop.f32.mrf.mxu0
  %v511 = vadd.f32 %v476, %v510
  %512 = vmatmul.f32.gmra.mxu0 %v424
  %v513 = vpop.f32.mrf.mxu0
  %v514 = vadd.f32 %v476, %v513
  %515 = vmatmul.f32.gmra.mxu0 %v427
  %v516 = vpop.f32.mrf.mxu0
  %v517 = vadd.f32 %v476, %v516
  %518 = vdwg.mxu0
  %vm519 = vcmask 15360
  %v521 = vsel %vm519, %v86, 0
  %v524 = vsel %vm519, %v87, 0
  %v527 = vsel %vm519, %v88, 0
  %v530 = vsel %vm519, %v89, 0
  %v533 = vsel %vm519, %v90, 0
  %v536 = vsel %vm519, %v91, 0
  %v539 = vsel %vm519, %v92, 0
  %v542 = vsel %vm519, %v93, 0
  %vm544 = vcmask 1041408
  %v546 = vsel %vm544, %v396, 0
  %548 = vmatpush.msra.mxu0 0.0
  %549 = vmatpush.msra.mxu0 0.0
  %550 = vmatpush.msra.mxu0 0.0
  %551 = vmatpush.msra.mxu0 0.0
  %552 = vmatpush.msra.mxu0 0.0
  %553 = vmatpush.msra.mxu0 0.0
  %554 = vmatpush.msra.mxu0 0.0
  %555 = vmatpush.msra.mxu0 0.0
  %556 = vmatpush.msra.mxu0 0.0
  %557 = vmatpush.msra.mxu0 0.0
  %558 = vmatpush.msra.mxu0 0.0
  %559 = vmatpush.msra.mxu0 0.0
  %560 = vmatpush.msra.mxu0 0.0
  %561 = vmatpush.msra.mxu0 0.0
  %562 = vmatpush.msra.mxu0 0.0
  %563 = vmatpush.msra.mxu0 %v546
  %564 = vmatmul.f32.gmra.mxu0 %v521
  %v565 = vpop.f32.mrf.mxu0
  %v566 = vadd.f32 0.0, %v565
  %567 = vmatmul.f32.gmra.mxu0 %v524
  %v568 = vpop.f32.mrf.mxu0
  %v569 = vadd.f32 0.0, %v568
  %570 = vmatmul.f32.gmra.mxu0 %v527
  %v571 = vpop.f32.mrf.mxu0
  %v572 = vadd.f32 0.0, %v571
  %573 = vmatmul.f32.gmra.mxu0 %v530
  %v574 = vpop.f32.mrf.mxu0
  %v575 = vadd.f32 0.0, %v574
  %576 = vmatmul.f32.gmra.mxu0 %v533
  %v577 = vpop.f32.mrf.mxu0
  %v578 = vadd.f32 0.0, %v577
  %579 = vmatmul.f32.gmra.mxu0 %v536
  %v580 = vpop.f32.mrf.mxu0
  %v581 = vadd.f32 0.0, %v580
  %582 = vmatmul.f32.gmra.mxu0 %v539
  %v583 = vpop.f32.mrf.mxu0
  %v584 = vadd.f32 0.0, %v583
  %585 = vmatmul.f32.gmra.mxu0 %v542
  %v586 = vpop.f32.mrf.mxu0
  %v587 = vadd.f32 0.0, %v586
  %588 = vdwg.mxu0
  %v589 = vmul.f32 %v566, %v447
  %v590 = vmul.f32 %v569, %v450
  %v591 = vmul.f32 %v572, %v453
  %v592 = vmul.f32 %v575, %v456
  %v593 = vmul.f32 %v578, %v459
  %v594 = vmul.f32 %v581, %v462
  %v595 = vmul.f32 %v584, %v465
  %v596 = vmul.f32 %v587, %v468
  %v598 = vsel %vm108, %v589, 0
  %v601 = vsel %vm108, %v590, 0
  %v604 = vsel %vm108, %v591, 0
  %v607 = vsel %vm108, %v592, 0
  %v610 = vsel %vm108, %v593, 0
  %v613 = vsel %vm108, %v594, 0
  %v616 = vsel %vm108, %v595, 0
  %v619 = vsel %vm108, %v596, 0
  %621 = vmatpush.msra.mxu0 0.0
  %622 = vmatpush.msra.mxu0 0.0
  %623 = vmatpush.msra.mxu0 0.0
  %624 = vmatpush.msra.mxu0 0.0
  %625 = vmatpush.msra.mxu0 0.0
  %626 = vmatpush.msra.mxu0 0.0
  %627 = vmatpush.msra.mxu0 0.0
  %628 = vmatpush.msra.mxu0 0.0
  %629 = vmatpush.msra.mxu0 0.0
  %630 = vmatpush.msra.mxu0 0.0
  %631 = vmatpush.msra.mxu0 0.0
  %632 = vmatpush.msra.mxu0 0.0
  %633 = vmatpush.msra.mxu0 %v98
  %634 = vmatpush.msra.mxu0 %v97
  %635 = vmatpush.msra.mxu0 %v96
  %636 = vmatpush.msra.mxu0 %v95
  %637 = vmatmul.f32.gmra.mxu0 %v598
  %v638 = vpop.f32.mrf.mxu0
  %v639 = vadd.f32 0.0, %v638
  %640 = vmatmul.f32.gmra.mxu0 %v601
  %v641 = vpop.f32.mrf.mxu0
  %v642 = vadd.f32 0.0, %v641
  %643 = vmatmul.f32.gmra.mxu0 %v604
  %v644 = vpop.f32.mrf.mxu0
  %v645 = vadd.f32 0.0, %v644
  %646 = vmatmul.f32.gmra.mxu0 %v607
  %v647 = vpop.f32.mrf.mxu0
  %v648 = vadd.f32 0.0, %v647
  %649 = vmatmul.f32.gmra.mxu0 %v610
  %v650 = vpop.f32.mrf.mxu0
  %v651 = vadd.f32 0.0, %v650
  %652 = vmatmul.f32.gmra.mxu0 %v613
  %v653 = vpop.f32.mrf.mxu0
  %v654 = vadd.f32 0.0, %v653
  %655 = vmatmul.f32.gmra.mxu0 %v616
  %v656 = vpop.f32.mrf.mxu0
  %v657 = vadd.f32 0.0, %v656
  %658 = vmatmul.f32.gmra.mxu0 %v619
  %v659 = vpop.f32.mrf.mxu0
  %v660 = vadd.f32 0.0, %v659
  %661 = vdwg.mxu0
  %vm662 = vcmask 64512
  %v663 = vsel %vm662, %v639, -inf
  %v664 = vsel %vm662, %v642, -inf
  %v665 = vsel %vm662, %v645, -inf
  %v666 = vsel %vm662, %v648, -inf
  %v667 = vsel %vm662, %v651, -inf
  %v668 = vmax.f32 %v663, %v667
  %v669 = vsel %vm662, %v654, -inf
  %v670 = vmax.f32 %v664, %v669
  %v671 = vsel %vm662, %v657, -inf
  %v672 = vmax.f32 %v665, %v671
  %v673 = vsel %vm662, %v660, -inf
  %v674 = vmax.f32 %v666, %v673
  %v675 = vmax.f32 %v668, %v670
  %v676 = vmax.f32 %v672, %v674
  %v677 = vmax.f32 %v675, %v676
  %v678 = vrot.slane %v677, 4
  %v679 = vmax.f32 %v677, %v678
  %v680 = vrot.slane %v679, 2
  %v681 = vmax.f32 %v679, %v680
  %v682 = vrot.slane %v681, 1
  %v683 = vmax.f32 %v681, %v682
  %v684 = vsub.f32 %v639, %v683
  %v685 = vsub.f32 %v642, %v683
  %v686 = vsub.f32 %v645, %v683
  %v687 = vsub.f32 %v648, %v683
  %v688 = vsub.f32 %v651, %v683
  %v689 = vsub.f32 %v654, %v683
  %v690 = vsub.f32 %v657, %v683
  %v691 = vsub.f32 %v660, %v683
  %v692 = vmul.f32 %v684, 1.442695
  %v693 = vpow.pop %v692
  %v694 = vmul.f32 %v685, 1.442695
  %v695 = vpow.pop %v694
  %v696 = vmul.f32 %v686, 1.442695
  %v697 = vpow.pop %v696
  %v698 = vmul.f32 %v687, 1.442695
  %v699 = vpow.pop %v698
  %v700 = vmul.f32 %v688, 1.442695
  %v701 = vpow.pop %v700
  %v702 = vmul.f32 %v689, 1.442695
  %v703 = vpow.pop %v702
  %v704 = vmul.f32 %v690, 1.442695
  %v705 = vpow.pop %v704
  %v706 = vmul.f32 %v691, 1.442695
  %v707 = vpow.pop %v706
  %vm708 = vcmask 523264
  %v710 = vsel %vm708, %v94, 0
  %712 = vmatpush.msra.mxu0 0.0
  %713 = vmatpush.msra.mxu0 0.0
  %714 = vmatpush.msra.mxu0 0.0
  %715 = vmatpush.msra.mxu0 0.0
  %716 = vmatpush.msra.mxu0 0.0
  %717 = vmatpush.msra.mxu0 0.0
  %718 = vmatpush.msra.mxu0 0.0
  %719 = vmatpush.msra.mxu0 0.0
  %720 = vmatpush.msra.mxu0 %v707
  %721 = vmatpush.msra.mxu0 %v705
  %722 = vmatpush.msra.mxu0 %v703
  %723 = vmatpush.msra.mxu0 %v701
  %724 = vmatpush.msra.mxu0 %v699
  %725 = vmatpush.msra.mxu0 %v697
  %726 = vmatpush.msra.mxu0 %v695
  %727 = vmatpush.msra.mxu0 %v693
  %728 = vmatmul.f32.gmra.mxu0 %v710
  %v729 = vpop.f32.mrf.mxu0
  %v730 = vadd.f32 0.0, %v729
  %731 = vdwg.mxu0
  %v732 = vrcp.pop %v730
  %v734 = vsel %vm544, %v732, 0
  %736 = vmatpush.msra.mxu0 0.0
  %737 = vmatpush.msra.mxu0 0.0
  %738 = vmatpush.msra.mxu0 0.0
  %739 = vmatpush.msra.mxu0 0.0
  %740 = vmatpush.msra.mxu0 0.0
  %741 = vmatpush.msra.mxu0 0.0
  %742 = vmatpush.msra.mxu0 0.0
  %743 = vmatpush.msra.mxu0 0.0
  %744 = vmatpush.msra.mxu0 0.0
  %745 = vmatpush.msra.mxu0 0.0
  %746 = vmatpush.msra.mxu0 0.0
  %747 = vmatpush.msra.mxu0 0.0
  %748 = vmatpush.msra.mxu0 0.0
  %749 = vmatpush.msra.mxu0 0.0
  %750 = vmatpush.msra.mxu0 0.0
  %751 = vmatpush.msra.mxu0 %v734
  %752 = vmatmul.f32.gmra.mxu0 %v521
  %v753 = vpop.f32.mrf.mxu0
  %v754 = vadd.f32 0.0, %v753
  %755 = vmatmul.f32.gmra.mxu0 %v524
  %v756 = vpop.f32.mrf.mxu0
  %v757 = vadd.f32 0.0, %v756
  %758 = vmatmul.f32.gmra.mxu0 %v527
  %v759 = vpop.f32.mrf.mxu0
  %v760 = vadd.f32 0.0, %v759
  %761 = vmatmul.f32.gmra.mxu0 %v530
  %v762 = vpop.f32.mrf.mxu0
  %v763 = vadd.f32 0.0, %v762
  %764 = vmatmul.f32.gmra.mxu0 %v533
  %v765 = vpop.f32.mrf.mxu0
  %v766 = vadd.f32 0.0, %v765
  %767 = vmatmul.f32.gmra.mxu0 %v536
  %v768 = vpop.f32.mrf.mxu0
  %v769 = vadd.f32 0.0, %v768
  %770 = vmatmul.f32.gmra.mxu0 %v539
  %v771 = vpop.f32.mrf.mxu0
  %v772 = vadd.f32 0.0, %v771
  %773 = vmatmul.f32.gmra.mxu0 %v542
  %v774 = vpop.f32.mrf.mxu0
  %v775 = vadd.f32 0.0, %v774
  %776 = vdwg.mxu0
  %v777 = vmul.f32 %v693, %v754
  %v778 = vmul.f32 %v695, %v757
  %v779 = vmul.f32 %v697, %v760
  %v780 = vmul.f32 %v699, %v763
  %v781 = vmul.f32 %v701, %v766
  %v782 = vmul.f32 %v703, %v769
  %v783 = vmul.f32 %v705, %v772
  %v784 = vmul.f32 %v707, %v775
  %v786 = vsel %vm662, %v777, 0
  %v789 = vsel %vm662, %v778, 0
  %v792 = vsel %vm662, %v779, 0
  %v795 = vsel %vm662, %v780, 0
  %v798 = vsel %vm662, %v781, 0
  %v801 = vsel %vm662, %v782, 0
  %v804 = vsel %vm662, %v783, 0
  %v807 = vsel %vm662, %v784, 0
  %809 = vmatpush.msra.mxu0 0.0
  %810 = vmatpush.msra.mxu0 0.0
  %811 = vmatpush.msra.mxu0 0.0
  %812 = vmatpush.msra.mxu0 0.0
  %813 = vmatpush.msra.mxu0 0.0
  %814 = vmatpush.msra.mxu0 0.0
  %815 = vmatpush.msra.mxu0 0.0
  %816 = vmatpush.msra.mxu0 0.0
  %817 = vmatpush.msra.mxu0 0.0
  %818 = vmatpush.msra.mxu0 0.0
  %819 = vmatpush.msra.mxu0 0.0
  %820 = vmatpush.msra.mxu0 0.0
  %821 = vmatpush.msra.mxu0 0.0
  %822 = vmatpush.msra.mxu0 0.0
  %823 = vmatpush.msra.mxu0 0.0
  %824 = vmatpush.msra.mxu0 %v99
  %825 = vmatmul.f32.gmra.mxu0 %v786
  %v826 = vpop.f32.mrf.mxu0
  %v827 = vadd.f32 0.0, %v826
  %828 = vmatmul.f32.gmra.mxu0 %v789
  %v829 = vpop.f32.mrf.mxu0
  %v830 = vadd.f32 0.0, %v829
  %831 = vmatmul.f32.gmra.mxu0 %v792
  %v832 = vpop.f32.mrf.mxu0
  %v833 = vadd.f32 0.0, %v832
  %834 = vmatmul.f32.gmra.mxu0 %v795
  %v835 = vpop.f32.mrf.mxu0
  %v836 = vadd.f32 0.0, %v835
  %837 = vmatmul.f32.gmra.mxu0 %v798
  %v838 = vpop.f32.mrf.mxu0
  %v839 = vadd.f32 0.0, %v838
  %840 = vmatmul.f32.gmra.mxu0 %v801
  %v841 = vpop.f32.mrf.mxu0
  %v842 = vadd.f32 0.0, %v841
  %843 = vmatmul.f32.gmra.mxu0 %v804
  %v844 = vpop.f32.mrf.mxu0
  %v845 = vadd.f32 0.0, %v844
  %846 = vmatmul.f32.gmra.mxu0 %v807
  %v847 = vpop.f32.mrf.mxu0
  %v848 = vadd.f32 0.0, %v847
  %849 = vdwg.mxu0
  %v850 = vmul.f32 %v827, %v496
  %v851 = vmul.f32 %v830, %v499
  %v852 = vmul.f32 %v833, %v502
  %v853 = vmul.f32 %v836, %v505
  %v854 = vmul.f32 %v839, %v508
  %v855 = vmul.f32 %v842, %v511
  %v856 = vmul.f32 %v845, %v514
  %v857 = vmul.f32 %v848, %v517
  %858 = vmatpush.msra.mxu0 0.0
  %859 = vmatpush.msra.mxu0 0.0
  %860 = vmatpush.msra.mxu0 0.0
  %861 = vmatpush.msra.mxu0 0.0
  %862 = vmatpush.msra.mxu0 0.0
  %863 = vmatpush.msra.mxu0 0.0
  %864 = vmatpush.msra.mxu0 0.0
  %865 = vmatpush.msra.mxu0 0.0
  %866 = vmatpush.msra.mxu0 %v857
  %867 = vmatpush.msra.mxu0 %v856
  %868 = vmatpush.msra.mxu0 %v855
  %869 = vmatpush.msra.mxu0 %v854
  %870 = vmatpush.msra.mxu0 %v853
  %871 = vmatpush.msra.mxu0 %v852
  %872 = vmatpush.msra.mxu0 %v851
  %873 = vmatpush.msra.mxu0 %v850
  %874 = vmatmul.f32.gmra.mxu0 %v710
  %v875 = vpop.f32.mrf.mxu0
  %v876 = vadd.f32 0.0, %v875
  %877 = vdwg.mxu0
  %v878 = vld [vmem:[%s16] sm:$0xff]
  %v879 = vld [vmem:[%s16 + $0x8] sm:$0xff]
  %v880 = vld [vmem:[%s16 + $0x10] sm:$0xff]
  %v881 = vld [vmem:[%s16 + $0x18] sm:$0xff]
  %v882 = vld [vmem:[%s17] sm:$0x1]
  %v884 = vperm.slane %v882, 0
  %v887 = vsel %vm108, %v876, 0
  %889 = vmatpush.msra.mxu0 0.0
  %890 = vmatpush.msra.mxu0 0.0
  %891 = vmatpush.msra.mxu0 0.0
  %892 = vmatpush.msra.mxu0 0.0
  %893 = vmatpush.msra.mxu0 0.0
  %894 = vmatpush.msra.mxu0 0.0
  %895 = vmatpush.msra.mxu0 0.0
  %896 = vmatpush.msra.mxu0 0.0
  %897 = vmatpush.msra.mxu0 0.0
  %898 = vmatpush.msra.mxu0 0.0
  %899 = vmatpush.msra.mxu0 0.0
  %900 = vmatpush.msra.mxu0 0.0
  %901 = vmatpush.msra.mxu0 %v881
  %902 = vmatpush.msra.mxu0 %v880
  %903 = vmatpush.msra.mxu0 %v879
  %904 = vmatpush.msra.mxu0 %v878
  %905 = vmatmul.f32.gmra.mxu0 %v887
  %v906 = vpop.f32.mrf.mxu0
  %v907 = vadd.f32 %v884, %v906
  %908 = vdwg.mxu0
  %909 = vmatpush.msra.mxu0 0.0
  %910 = vmatpush.msra.mxu0 0.0
  %911 = vmatpush.msra.mxu0 0.0
  %912 = vmatpush.msra.mxu0 0.0
  %913 = vmatpush.msra.mxu0 0.0
  %914 = vmatpush.msra.mxu0 0.0
  %915 = vmatpush.msra.mxu0 0.0
  %916 = vmatpush.msra.mxu0 0.0
  %917 = vmatpush.msra.mxu0 %v85
  %918 = vmatpush.msra.mxu0 %v84
  %919 = vmatpush.msra.mxu0 %v83
  %920 = vmatpush.msra.mxu0 %v82
  %921 = vmatpush.msra.mxu0 %v81
  %922 = vmatpush.msra.mxu0 %v80
  %923 = vmatpush.msra.mxu0 %v79
  %924 = vmatpush.msra.mxu0 %v78
  %925 = vmatmul.f32.gmra.mxu0 %v710
  %v926 = vpop.f32.mrf.mxu0
  %v927 = vadd.f32 0.0, %v926
  %928 = vdwg.mxu0
  %v929 = vmul.f32 %v927, 0.03125
  %v930 = vadd.f32 %v929, %v907
  %v931 = vld [vmem:[%s18] sm:$0x1]
  %v932 = vld [vmem:[%s19] sm:$0x1]
  %v933 = vsel %vm135, %v930, 0.0
  %934 = vadd.xlane.f32.xlu0 %v933
  %v935 = vpop.xlane.xlu0 %934
  %v936 = vmul.f32 %v935, %v145
  %v937 = vsub.f32 %v930, %v936
  %v938 = vmul.f32 %v937, %v937
  %v939 = vsel %vm135, %v938, 0.0
  %940 = vadd.xlane.f32.xlu0 %v939
  %v941 = vpop.xlane.xlu0 %940
  %v942 = vmul.f32 %v941, %v145
  %v943 = vadd.f32 %v942, 1e-05
  %v944 = vrsqrt.pop %v943
  %v945 = vmul.f32 %v944, %v943
  %v946 = vmul.f32 %v945, %v944
  %v947 = vmul.f32 0.5, %v946
  %v948 = vsub.f32 1.5, %v947
  %v949 = vmul.f32 %v944, %v948
  %vm950 = vweird.f32 %v943
  %vm951 = vweird.f32 %v944
  %vm952 = vmor %vm950, %vm951
  %v953 = vsel %vm952, %v944, %v949
  %v954 = vmul.f32 %v937, %v953
  %v956 = vperm.slane %v931, 0
  %v958 = vmul.f32 %v954, %v956
  %v960 = vperm.slane %v932, 0
  %v962 = vadd.f32 %v958, %v960
  %v963 = vld [vmem:[%s20] sm:$0xff]
  %v964 = vld [vmem:[%s20 + $0x8] sm:$0xff]
  %v965 = vld [vmem:[%s20 + $0x10] sm:$0xff]
  %v966 = vld [vmem:[%s20 + $0x18] sm:$0xff]
  %v967 = vld [vmem:[%s21] sm:$0x1]
  %v969 = vperm.slane %v967, 0
  %v972 = vsel %vm108, %v962, 0
  %974 = vmatpush.msra.mxu0 0.0
  %975 = vmatpush.msra.mxu0 0.0
  %976 = vmatpush.msra.mxu0 0.0
  %977 = vmatpush.msra.mxu0 0.0
  %978 = vmatpush.msra.mxu0 0.0
  %979 = vmatpush.msra.mxu0 0.0
  %980 = vmatpush.msra.mxu0 0.0
  %981 = vmatpush.msra.mxu0 0.0
  %982 = vmatpush.msra.mxu0 0.0
  %983 = vmatpush.msra.mxu0 0.0
  %984 = vmatpush.msra.mxu0 0.0
  %985 = vmatpush.msra.mxu0 0.0
  %986 = vmatpush.msra.mxu0 %v966
  %987 = vmatpush.msra.mxu0 %v965
  %988 = vmatpush.msra.mxu0 %v964
  %989 = vmatpush.msra.mxu0 %v963
  %990 = vmatmul.f32.gmra.mxu0 %v972
  %v991 = vpop.f32.mrf.mxu0
  %v992 = vadd.f32 %v969, %v991
  %993 = vdwg.mxu0
  %v994 = vmul.f32 %v992, 1.702
  %v995 = vxor.u32 %v994, 2147483648
  %v996 = vmul.f32 %v995, 1.442695
  %v997 = vpow.pop %v996
  %v998 = vadd.f32 %v997, 1.0
  %v999 = vrcp.pop %v998
  %v1000 = vmul.f32 %v998, %v999
  %v1001 = vsub.f32 1.0, %v1000
  %v1002 = vmul.f32 %v999, %v1001
  %v1003 = vadd.f32 %v999, %v1002
  %vm1004 = vweird.f32 %v998
  %vm1005 = vweird.f32 %v999
  %vm1006 = vmor %vm1004, %vm1005
  %v1007 = vsel %vm1006, %v999, %v1003
  %v1008 = vand.u32 2147483647, %v998
  %vm1009 = vcmp.eq.f32.partialorder %v1008, 8.507059e+37
  %v1010 = vand.u32 %v998, 2147483648
  %v1011 = vor.u32 1.1754944e-38, %v1010
  %v1012 = vsel %vm1009, %v1011, %v1007
  %v1013 = vmul.f32 1.0, %v1012
  %v1014 = vmul.f32 %v992, %v1013
  %v1015 = vld [vmem:[%s22] sm:$0xff]
  %v1016 = vld [vmem:[%s22 + $0x8] sm:$0xff]
  %v1017 = vld [vmem:[%s22 + $0x10] sm:$0xff]
  %v1018 = vld [vmem:[%s22 + $0x18] sm:$0xff]
  %v1019 = vld [vmem:[%s22 + $0x20] sm:$0xff]
  %v1020 = vld [vmem:[%s22 + $0x28] sm:$0xff]
  %v1021 = vld [vmem:[%s22 + $0x30] sm:$0xff]
  %v1022 = vld [vmem:[%s22 + $0x38] sm:$0xff]
  %v1023 = vld [vmem:[%s22 + $0x40] sm:$0xff]
  %v1024 = vld [vmem:[%s22 + $0x48] sm:$0xff]
  %v1025 = vld [vmem:[%s22 + $0x50] sm:$0xff]
  %v1026 = vld [vmem:[%s22 + $0x58] sm:$0xff]
  %v1027 = vld [vmem:[%s22 + $0x60] sm:$0xff]
  %v1028 = vld [vmem:[%s22 + $0x68] sm:$0xff]
  %v1029 = vld [vmem:[%s22 + $0x70] sm:$0xff]
  %v1030 = vld [vmem:[%s22 + $0x78] sm:$0xff]
  %1031 = vmatpush.msra.mxu0 %v1030
  %1032 = vmatpush.msra.mxu0 %v1029
  %1033 = vmatpush.msra.mxu0 %v1028
  %1034 = vmatpush.msra.mxu0 %v1027
  %1035 = vmatpush.msra.mxu0 %v1026
  %1036 = vmatpush.msra.mxu0 %v1025
  %1037 = vmatpush.msra.mxu0 %v1024
  %1038 = vmatpush.msra.mxu0 %v1023
  %1039 = vmatpush.msra.mxu0 %v1022
  %1040 = vmatpush.msra.mxu0 %v1021
  %1041 = vmatpush.msra.mxu0 %v1020
  %1042 = vmatpush.msra.mxu0 %v1019
  %1043 = vmatpush.msra.mxu0 %v1018
  %1044 = vmatpush.msra.mxu0 %v1017
  %1045 = vmatpush.msra.mxu0 %v1016
  %1046 = vmatpush.msra.mxu0 %v1015
  %1047 = vmatmul.f32.gmra.mxu0 %v1014
  %v1048 = vpop.f32.mrf.mxu0
  %v1049 = vadd.f32 0.0, %v1048
  %1050 = vdwg.mxu0
  %v1051 = vadd.f32 %v930, %v1049
  %v1052 = vld [vmem:[%s23] sm:$0x1]
  %v1054 = vperm.slane %v1052, 0
  %v1056 = vadd.f32 %v1051, %v1054
  %v1057 = vmax.f32 %v1056, 0.0
  %1058 = vst.msk [vmem:[%s24] sm:$0x3] %vm135, %v1057
  // Predicated region
  $region98: #{combiner_forward.4} parent=0 // pred_check
    _
  $region99: #{combiner_forward.4} parent=0 // pred_check_branch
    %1060 = sbr.rel (0) target = $region101
  $region100: #{combiner_forward.4} parent=0 // pred_region
    _
  $region101: #{combiner_forward.4} parent=0 // pred_fallthru
    _
  // Predicated region
  $region102: #{combiner_forward.4} parent=0 // pred_check
    _
  $region103: #{combiner_forward.4} parent=0 // pred_check_branch
    %1062 = sbr.rel (0) target = $region105
  $region104: #{combiner_forward.4} parent=0 // pred_region
    _
  $region105: #{combiner_forward.4} parent=0 // pred_fallthru
    _

</llo_original>
